<compile_context>
chip_gen: v6e
topology: v6e:2x2x1
jax: 0.10.0
libtpu: 0.0.40
codegen_flags: <defaults>
</compile_context>

<pallas_src>
import jax
import jax.numpy as jnp
import numpy as np
from jax import lax
from jax.experimental import pallas as pl
from jax.experimental.pallas import tpu as pltpu

_EPS_W = 1e-6     # epsilon added to the hub weights (as in the torch module)
_LANE = 128


def _round_up(x, m):
    return (x + m - 1) // m * m


# ---------------------------------------------------------------------------
# Kernel 1: row-wise L2 normalization of the stacked views (done ONCE).
# ---------------------------------------------------------------------------
def _normalize_kernel(x_ref, o_ref):
    x = x_ref[...].astype(jnp.float32)                       # (TM, Dp)
    sq = jnp.sum(x * x, axis=-1, keepdims=True)              # (TM, 1)
    # F.normalize: v / max(||v||, 1e-12) == v * rsqrt(max(||v||^2, 1e-24))
    inv = lax.rsqrt(jnp.maximum(sq, jnp.float32(1e-24)))
    o_ref[...] = (x * inv).astype(o_ref.dtype)


# ---------------------------------------------------------------------------
# Kernel 2: all pairwise similarity-alignment loss sums in ONE pallas_call.
# grid = (pair, i, j); pair index tables are scalar-prefetched into SMEM.
# ---------------------------------------------------------------------------
def _pair_loss_kernel(u_idx_ref, v_idx_ref,     # SMEM (P,), used by index_maps
                      zu_i_ref, zu_j_ref,       # bf16 (TM, Dp) / (TN, Dp)
                      zv_i_ref, zv_j_ref,       # bf16 (TM, Dp) / (TN, Dp)
                      wu_i_ref,                 # f32  (TM, 1)   row weights
                      wv_j_ref,                 # f32  (1, TN)   col weights
                      out_ref,                  # f32  (1, 128)  per-pair sum
                      acc_ref):                 # f32  (1, TN)   VMEM scratch
    del u_idx_ref, v_idx_ref
    i = pl.program_id(1)
    j = pl.program_id(2)

    @pl.when((i == 0) & (j == 0))
    def _init():
        acc_ref[...] = jnp.zeros_like(acc_ref)

    # Gram blocks on the MXU: bf16 x bf16 -> f32 accumulation (single pass).
    dn = (((1,), (1,)), ((), ()))               # contract feature dim: A @ B.T
    g1 = lax.dot_general(zu_i_ref[...], zu_j_ref[...], dn,
                         preferred_element_type=jnp.float32)
    g2 = lax.dot_general(zv_i_ref[...], zv_j_ref[...], dn,
                         preferred_element_type=jnp.float32)

    w = (wu_i_ref[...] + _EPS_W) * (wv_j_ref[...] + _EPS_W)   # (TM, TN)
    d = w * (g1 - g2)                                         # (S1 - S2) tile
    acc_ref[...] += jnp.sum(d * d, axis=0, keepdims=True)     # (1, TN)

    @pl.when((i == pl.num_programs(1) - 1) & (j == pl.num_programs(2) - 1))
    def _finalize():
        total = jnp.sum(acc_ref[...], axis=1, keepdims=True)  # (1, 1)
        out_ref[...] = jnp.broadcast_to(total, out_ref.shape)


# ---------------------------------------------------------------------------
# Jitted driver: normalize once, then one batched pair-loss call.
# ---------------------------------------------------------------------------
@jax.jit
def _sim_align_pallas(z, w, u_idx, v_idx):
    """z: (V, N, D), w: (V, N), u_idx/v_idx: (P,) int32 -> (P,) f32 losses."""
    V, N, D = z.shape
    P = u_idx.shape[0]

    n_pad = _round_up(N, _LANE)
    d_pad = _round_up(D, _LANE)
    tm = 256 if (n_pad % 256 == 0) else _LANE
    tn = tm

    # Zero padding is a mathematical no-op: padded rows normalize to exactly 0
    # and contribute 0 to every Gram product and to the squared-diff sum.
    z_p = jnp.pad(z, ((0, 0), (0, n_pad - N), (0, d_pad - D)))
    w_p = jnp.pad(w.astype(jnp.float32), ((0, 0), (0, n_pad - N)))

    # --- normalize every view once; bf16 output halves per-pair HBM traffic --
    zn = pl.pallas_call(
        _normalize_kernel,
        out_shape=jax.ShapeDtypeStruct((V, n_pad, d_pad), jnp.bfloat16),
        grid=(V, n_pad // tm),
        in_specs=[pl.BlockSpec((None, tm, d_pad), lambda vv, ii: (vv, ii, 0))],
        out_specs=pl.BlockSpec((None, tm, d_pad), lambda vv, ii: (vv, ii, 0)),
        compiler_params=pltpu.CompilerParams(
            dimension_semantics=("parallel", "parallel")),
    )(z_p)

    w_col = w_p[:, :, None]            # (V, n_pad, 1)  row weights
    w_row = w_p[:, None, :]            # (V, 1, n_pad)  col weights (lane dense)

    sums = pl.pallas_call(
        _pair_loss_kernel,
        out_shape=jax.ShapeDtypeStruct((P, 1, _LANE), jnp.float32),
        grid_spec=pltpu.PrefetchScalarGridSpec(
            num_scalar_prefetch=2,
            grid=(P, n_pad // tm, n_pad // tn),
            in_specs=[
                # Z_u rows i, Z_u rows j, Z_v rows i, Z_v rows j
                pl.BlockSpec((None, tm, d_pad), lambda p, i, j, ui, vi: (ui[p], i, 0)),
                pl.BlockSpec((None, tn, d_pad), lambda p, i, j, ui, vi: (ui[p], j, 0)),
                pl.BlockSpec((None, tm, d_pad), lambda p, i, j, ui, vi: (vi[p], i, 0)),
                pl.BlockSpec((None, tn, d_pad), lambda p, i, j, ui, vi: (vi[p], j, 0)),
                # hub weights: rows of u (column), cols of v (lane-dense row)
                pl.BlockSpec((None, tm, 1), lambda p, i, j, ui, vi: (ui[p], i, 0)),
                pl.BlockSpec((None, 1, tn), lambda p, i, j, ui, vi: (vi[p], 0, j)),
            ],
            out_specs=pl.BlockSpec((None, 1, _LANE),
                                   lambda p, i, j, ui, vi: (p, 0, 0)),
            scratch_shapes=[pltpu.VMEM((1, tn), jnp.float32)],
        ),
        compiler_params=pltpu.CompilerParams(
            dimension_semantics=("parallel", "arbitrary", "arbitrary")),
    )(u_idx, v_idx, zn, zn, zn, zn, w_col, w_row)

    # MSE over N*N elements, then divided again by N*N  ->  sum / N^4.
    return sums[:, 0, 0] / (jnp.float32(N) ** 4)


def similarity_alignment_loss(view_features, hub_vlist):
    """Mirrors SimilarityAlignmentLoss.forward: returns {'uv': scalar loss}."""
    n_views = len(view_features)
    pairs = [(u, v) for u in range(n_views - 1) for v in range(u + 1, n_views)]
    if not pairs:
        return {}
    # TODO(synk): only the dense num_samples < 5000 branch of
    # _pairing_loss_two_views is implemented; the >=5000 block-diagonal
    # batched branch (different math) is not.
    z = jnp.stack(view_features, axis=0)
    w = jnp.stack(hub_vlist, axis=0)
    u_idx = jnp.asarray([p[0] for p in pairs], dtype=jnp.int32)
    v_idx = jnp.asarray([p[1] for p in pairs], dtype=jnp.int32)
    losses = _sim_align_pallas(z, w, u_idx, v_idx)
    return {f"{u}{v}": losses[k] for k, (u, v) in enumerate(pairs)}


# ---------------------------------------------------------------------------
# Pure-JAX references for the self-test.
# ---------------------------------------------------------------------------
def _reference_losses(view_features, hub_vlist, matched_precision):
    """matched_precision=True mimics the kernel's bf16 Gram matmuls;
    False is the straight f32 (HIGHEST) math of the original module."""
    eps = jnp.float32(_EPS_W)
    n_views = len(view_features)
    n = view_features[0].shape[0]
    zs = []
    for zf in view_features:
        zf = zf.astype(jnp.float32)
        inv = lax.rsqrt(jnp.maximum(
            jnp.sum(zf * zf, axis=-1, keepdims=True), jnp.float32(1e-24)))
        zn = zf * inv
        zs.append(zn.astype(jnp.bfloat16) if matched_precision else zn)
    out = {}
    for u in range(n_views - 1):
        for v in range(u + 1, n_views):
            if matched_precision:
                g1 = jnp.dot(zs[u], zs[u].T, preferred_element_type=jnp.float32)
                g2 = jnp.dot(zs[v], zs[v].T, preferred_element_type=jnp.float32)
            else:
                g1 = jnp.dot(zs[u], zs[u].T, precision=lax.Precision.HIGHEST)
                g2 = jnp.dot(zs[v], zs[v].T, precision=lax.Precision.HIGHEST)
            wm = jnp.outer(hub_vlist[u].astype(jnp.float32) + eps,
                           hub_vlist[v].astype(jnp.float32) + eps)
            d = wm * (g1 - g2)
            out[f"{u}{v}"] = jnp.sum(d * d) / (jnp.float32(n) ** 4)
    return out


if __name__ == "__main__":
    # Small deterministic example: n_views=3, N=128 samples, D=64 features.
    n_views, N, D = 3, 128, 64
    key = jax.random.PRNGKey(0)
    keys = jax.random.split(key, 2 * n_views)

    view_features = [jax.random.normal(keys[i], (N, D), dtype=jnp.float32)
                     for i in range(n_views)]
    hub_vlist = [jax.random.uniform(keys[n_views + i], (N,), dtype=jnp.float32)
                 for i in range(n_views)]

    losses = similarity_alignment_loss(view_features, hub_vlist)
    losses = jax.tree_util.tree_map(jax.block_until_ready, losses)

    ref_matched = _reference_losses(view_features, hub_vlist,
                                    matched_precision=True)
    ref_f32 = _reference_losses(view_features, hub_vlist,
                                matched_precision=False)
    for k, got in losses.items():
        # Tight check against a reference using the same bf16 Gram matmuls.
        np.testing.assert_allclose(np.asarray(got), np.asarray(ref_matched[k]),
                                   rtol=1e-3, atol=1e-12)
        # Looser semantic check against full-f32 math (bf16 MXU rounding).
        np.testing.assert_allclose(np.asarray(got), np.asarray(ref_f32[k]),
                                   rtol=2e-2, atol=1e-10)

    print("KERNEL_OK")
</pallas_src>

<mosaic_0001>
module attributes {stable_mosaic.version = 11 : i64} {
  func.func @_normalize_kernel(%arg0: i32, %arg1: i32, %arg2: memref<1x128x128xf32, #tpu.memory_space<vmem>>, %arg3: memref<1x128x128xbf16, #tpu.memory_space<vmem>>) attributes {dimension_semantics = [#tpu.dimension_semantics<parallel>, #tpu.dimension_semantics<parallel>], iteration_bounds = array<i64: 3, 1>, scalar_prefetch = 0 : i64, scratch_operands = 0 : i64, tpu.core_type = #tpu.core_type<tc>, window_params = [{transform_indices = @transform_0, window_bounds = array<i64: 1, 128, 128>}, {transform_indices = @transform_1, window_bounds = array<i64: 1, 128, 128>}]} {
    %c0 = arith.constant 0 : index
    %c0_0 = arith.constant 0 : index
    %c0_1 = arith.constant 0 : index
    %0 = vector.load %arg2[%c0, %c0_0, %c0_1] : memref<1x128x128xf32, #tpu.memory_space<vmem>>, vector<1x128x128xf32>
    %1 = vector.shape_cast %0 : vector<1x128x128xf32> to vector<128x128xf32>
    %2 = arith.mulf %1, %1 : vector<128x128xf32>
    %cst = arith.constant dense<0.000000e+00> : vector<128xf32>
    %3 = vector.multi_reduction <add>, %2, %cst [1] : vector<128x128xf32> to vector<128xf32>
    %4 = vector.shape_cast %3 : vector<128xf32> to vector<128x1xf32>
    %cst_2 = arith.constant 1.000000e-24 : f32
    %5 = vector.broadcast %cst_2 : f32 to vector<128x1xf32>
    %6 = arith.maximumf %4, %5 : vector<128x1xf32>
    %7 = math.rsqrt %6 : vector<128x1xf32>
    %8 = vector.broadcast %7 : vector<128x1xf32> to vector<128x128xf32>
    %9 = arith.mulf %1, %8 : vector<128x128xf32>
    %10 = arith.truncf %9 : vector<128x128xf32> to vector<128x128xbf16>
    %c0_3 = arith.constant 0 : index
    %c0_4 = arith.constant 0 : index
    %c0_5 = arith.constant 0 : index
    %11 = vector.load %arg3[%c0_3, %c0_4, %c0_5] : memref<1x128x128xbf16, #tpu.memory_space<vmem>>, vector<1x128x128xbf16>
    %12 = vector.shape_cast %11 : vector<1x128x128xbf16> to vector<128x128xbf16>
    %13 = vector.shape_cast %10 : vector<128x128xbf16> to vector<1x128x128xbf16>
    tpu.vector_store %arg3[%c0_3, %c0_4, %c0_5], %13 {strides = array<i32>} : memref<1x128x128xbf16, #tpu.memory_space<vmem>>, vector<1x128x128xbf16>,
    return
  }
  func.func @transform_0(%arg0: i32, %arg1: i32) -> (i32, i32, i32) {
    %c0_i32 = arith.constant 0 : i32
    %c0_i32_0 = arith.constant 0 : i32
    return %arg0, %arg1, %c0_i32 : i32, i32, i32
  }
  func.func @transform_1(%arg0: i32, %arg1: i32) -> (i32, i32, i32) {
    %c0_i32 = arith.constant 0 : i32
    %c0_i32_0 = arith.constant 0 : i32
    return %arg0, %arg1, %c0_i32 : i32, i32, i32
  }
}

module attributes {stable_mosaic.version = 11 : i64} {
  func.func @_pair_loss_kernel(%arg0: i32, %arg1: i32, %arg2: i32, %arg3: memref<3xi32, #tpu.memory_space<smem>>, %arg4: memref<3xi32, #tpu.memory_space<smem>>, %arg5: memref<1x128x128xbf16, #tpu.memory_space<vmem>>, %arg6: memref<1x128x128xbf16, #tpu.memory_space<vmem>>, %arg7: memref<1x128x128xbf16, #tpu.memory_space<vmem>>, %arg8: memref<1x128x128xbf16, #tpu.memory_space<vmem>>, %arg9: memref<1x128x1xf32, #tpu.memory_space<vmem>>, %arg10: memref<1x1x128xf32, #tpu.memory_space<vmem>>, %arg11: memref<1x1x128xf32, #tpu.memory_space<vmem>>, %arg12: memref<1x128xf32, #tpu.memory_space<vmem>>) attributes {dimension_semantics = [#tpu.dimension_semantics<parallel>, #tpu.dimension_semantics<arbitrary>, #tpu.dimension_semantics<arbitrary>], iteration_bounds = array<i64: 3, 1, 1>, scalar_prefetch = 2 : i64, scratch_operands = 1 : i64, tpu.core_type = #tpu.core_type<tc>, window_params = [{transform_indices = @transform_0, window_bounds = array<i64: 1, 128, 128>}, {transform_indices = @transform_1, window_bounds = array<i64: 1, 128, 128>}, {transform_indices = @transform_2, window_bounds = array<i64: 1, 128, 128>}, {transform_indices = @transform_3, window_bounds = array<i64: 1, 128, 128>}, {transform_indices = @transform_4, window_bounds = array<i64: 1, 128, 1>}, {transform_indices = @transform_5, window_bounds = array<i64: 1, 1, 128>}, {transform_indices = @transform_6, window_bounds = array<i64: 1, 1, 128>}]} {
    %c0_i32 = arith.constant 0 : i32
    %0 = arith.cmpi eq, %arg1, %c0_i32 : i32
    %c0_i32_0 = arith.constant 0 : i32
    %1 = arith.cmpi eq, %arg2, %c0_i32_0 : i32
    %2 = arith.andi %0, %1 : i1
    %3 = arith.extui %2 : i1 to i32
    %c0_i32_1 = arith.constant 0 : i32
    %4 = arith.cmpi ne, %3, %c0_i32_1 : i32
    scf.if %4 {
      %cst_30 = arith.constant 0.000000e+00 : f32
      %39 = vector.broadcast %cst_30 : f32 to vector<1x128xf32>
      %c0_31 = arith.constant 0 : index
      %c0_32 = arith.constant 0 : index
      %40 = vector.load %arg12[%c0_31, %c0_32] : memref<1x128xf32, #tpu.memory_space<vmem>>, vector<1x128xf32>
      tpu.vector_store %arg12[%c0_31, %c0_32], %39 {strides = array<i32>} : memref<1x128xf32, #tpu.memory_space<vmem>>, vector<1x128xf32>,
    } else {
    }
    %c0 = arith.constant 0 : index
    %c0_2 = arith.constant 0 : index
    %c0_3 = arith.constant 0 : index
    %5 = vector.load %arg5[%c0, %c0_2, %c0_3] : memref<1x128x128xbf16, #tpu.memory_space<vmem>>, vector<1x128x128xbf16>
    %6 = vector.shape_cast %5 : vector<1x128x128xbf16> to vector<128x128xbf16>
    %c0_4 = arith.constant 0 : index
    %c0_5 = arith.constant 0 : index
    %c0_6 = arith.constant 0 : index
    %7 = vector.load %arg6[%c0_4, %c0_5, %c0_6] : memref<1x128x128xbf16, #tpu.memory_space<vmem>>, vector<1x128x128xbf16>
    %8 = vector.shape_cast %7 : vector<1x128x128xbf16> to vector<128x128xbf16>
    %cst = arith.constant dense<0.000000e+00> : vector<128x128xf32>
    %9 = tpu.matmul %6, %8, %cst {dimension_numbers = #tpu.dot_dimension_numbers<[1], [1], [0], [0], [0, 0, 1, 0], [], []>} : vector<128x128xbf16>, vector<128x128xbf16>, vector<128x128xf32> -> vector<128x128xf32>
    %c0_7 = arith.constant 0 : index
    %c0_8 = arith.constant 0 : index
    %c0_9 = arith.constant 0 : index
    %10 = vector.load %arg7[%c0_7, %c0_8, %c0_9] : memref<1x128x128xbf16, #tpu.memory_space<vmem>>, vector<1x128x128xbf16>
    %11 = vector.shape_cast %10 : vector<1x128x128xbf16> to vector<128x128xbf16>
    %c0_10 = arith.constant 0 : index
    %c0_11 = arith.constant 0 : index
    %c0_12 = arith.constant 0 : index
    %12 = vector.load %arg8[%c0_10, %c0_11, %c0_12] : memref<1x128x128xbf16, #tpu.memory_space<vmem>>, vector<1x128x128xbf16>
    %13 = vector.shape_cast %12 : vector<1x128x128xbf16> to vector<128x128xbf16>
    %cst_13 = arith.constant dense<0.000000e+00> : vector<128x128xf32>
    %14 = tpu.matmul %11, %13, %cst_13 {dimension_numbers = #tpu.dot_dimension_numbers<[1], [1], [0], [0], [0, 0, 1, 0], [], []>} : vector<128x128xbf16>, vector<128x128xbf16>, vector<128x128xf32> -> vector<128x128xf32>
    %c0_14 = arith.constant 0 : index
    %c0_15 = arith.constant 0 : index
    %c0_16 = arith.constant 0 : index
    %15 = vector.load %arg9[%c0_14, %c0_15, %c0_16] : memref<1x128x1xf32, #tpu.memory_space<vmem>>, vector<1x128x1xf32>
    %16 = vector.shape_cast %15 : vector<1x128x1xf32> to vector<128x1xf32>
    %cst_17 = arith.constant 9.99999997E-7 : f32
    %17 = vector.broadcast %cst_17 : f32 to vector<128x1xf32>
    %18 = arith.addf %16, %17 : vector<128x1xf32>
    %c0_18 = arith.constant 0 : index
    %c0_19 = arith.constant 0 : index
    %c0_20 = arith.constant 0 : index
    %19 = vector.load %arg10[%c0_18, %c0_19, %c0_20] : memref<1x1x128xf32, #tpu.memory_space<vmem>>, vector<1x1x128xf32>
    %20 = vector.shape_cast %19 : vector<1x1x128xf32> to vector<1x128xf32>
    %cst_21 = arith.constant 9.99999997E-7 : f32
    %21 = vector.broadcast %cst_21 : f32 to vector<1x128xf32>
    %22 = arith.addf %20, %21 : vector<1x128xf32>
    %23 = vector.broadcast %18 : vector<128x1xf32> to vector<128x128xf32>
    %24 = vector.broadcast %22 : vector<1x128xf32> to vector<128x128xf32>
    %25 = arith.mulf %23, %24 : vector<128x128xf32>
    %26 = arith.subf %9, %14 : vector<128x128xf32>
    %27 = arith.mulf %25, %26 : vector<128x128xf32>
    %c0_22 = arith.constant 0 : index
    %c0_23 = arith.constant 0 : index
    %28 = vector.load %arg12[%c0_22, %c0_23] : memref<1x128xf32, #tpu.memory_space<vmem>>, vector<1x128xf32>
    %29 = arith.mulf %27, %27 : vector<128x128xf32>
    %cst_24 = arith.constant dense<0.000000e+00> : vector<128xf32>
    %30 = vector.multi_reduction <add>, %29, %cst_24 [0] : vector<128x128xf32> to vector<128xf32>
    %31 = vector.shape_cast %30 : vector<128xf32> to vector<1x128xf32>
    %32 = arith.addf %28, %31 : vector<1x128xf32>
    %c0_25 = arith.constant 0 : index
    %c0_26 = arith.constant 0 : index
    %33 = vector.load %arg12[%c0_25, %c0_26] : memref<1x128xf32, #tpu.memory_space<vmem>>, vector<1x128xf32>
    tpu.vector_store %arg12[%c0_25, %c0_26], %32 {strides = array<i32>} : memref<1x128xf32, #tpu.memory_space<vmem>>, vector<1x128xf32>,
    %c0_i32_27 = arith.constant 0 : i32
    %34 = arith.cmpi eq, %arg1, %c0_i32_27 : i32
    %c0_i32_28 = arith.constant 0 : i32
    %35 = arith.cmpi eq, %arg2, %c0_i32_28 : i32
    %36 = arith.andi %34, %35 : i1
    %37 = arith.extui %36 : i1 to i32
    %c0_i32_29 = arith.constant 0 : i32
    %38 = arith.cmpi ne, %37, %c0_i32_29 : i32
    scf.if %38 {
      %c0_30 = arith.constant 0 : index
      %c0_31 = arith.constant 0 : index
      %39 = vector.load %arg12[%c0_30, %c0_31] : memref<1x128xf32, #tpu.memory_space<vmem>>, vector<1x128xf32>
      %cst_32 = arith.constant dense<0.000000e+00> : vector<1xf32>
      %40 = vector.multi_reduction <add>, %39, %cst_32 [1] : vector<1x128xf32> to vector<1xf32>
      %41 = vector.shape_cast %40 : vector<1xf32> to vector<1x1xf32>
      %42 = vector.shape_cast %41 : vector<1x1xf32> to vector<1x1xf32>
      %43 = vector.broadcast %42 : vector<1x1xf32> to vector<1x128xf32>
      %c0_33 = arith.constant 0 : index
      %c0_34 = arith.constant 0 : index
      %c0_35 = arith.constant 0 : index
      %44 = vector.load %arg11[%c0_33, %c0_34, %c0_35] : memref<1x1x128xf32, #tpu.memory_space<vmem>>, vector<1x1x128xf32>
      %45 = vector.shape_cast %44 : vector<1x1x128xf32> to vector<1x128xf32>
      %46 = vector.shape_cast %43 : vector<1x128xf32> to vector<1x1x128xf32>
      tpu.vector_store %arg11[%c0_33, %c0_34, %c0_35], %46 {strides = array<i32>} : memref<1x1x128xf32, #tpu.memory_space<vmem>>, vector<1x1x128xf32>,
    } else {
    }
    return
  }
  func.func @transform_0(%arg0: i32, %arg1: i32, %arg2: i32, %arg3: memref<3xi32, #tpu.memory_space<smem>>, %arg4: memref<3xi32, #tpu.memory_space<smem>>) -> (i32, i32, i32) {
    %0 = arith.index_cast %arg0 : i32 to index
    %1 = memref.load %arg3[%0] : memref<3xi32, #tpu.memory_space<smem>>
    %c0_i32 = arith.constant 0 : i32
    %c0_i32_0 = arith.constant 0 : i32
    return %1, %arg1, %c0_i32 : i32, i32, i32
  }
  func.func @transform_1(%arg0: i32, %arg1: i32, %arg2: i32, %arg3: memref<3xi32, #tpu.memory_space<smem>>, %arg4: memref<3xi32, #tpu.memory_space<smem>>) -> (i32, i32, i32) {
    %0 = arith.index_cast %arg0 : i32 to index
    %1 = memref.load %arg3[%0] : memref<3xi32, #tpu.memory_space<smem>>
    %c0_i32 = arith.constant 0 : i32
    %c0_i32_0 = arith.constant 0 : i32
    return %1, %arg2, %c0_i32 : i32, i32, i32
  }
  func.func @transform_2(%arg0: i32, %arg1: i32, %arg2: i32, %arg3: memref<3xi32, #tpu.memory_space<smem>>, %arg4: memref<3xi32, #tpu.memory_space<smem>>) -> (i32, i32, i32) {
    %0 = arith.index_cast %arg0 : i32 to index
    %1 = memref.load %arg4[%0] : memref<3xi32, #tpu.memory_space<smem>>
    %c0_i32 = arith.constant 0 : i32
    %c0_i32_0 = arith.constant 0 : i32
    return %1, %arg1, %c0_i32 : i32, i32, i32
  }
  func.func @transform_3(%arg0: i32, %arg1: i32, %arg2: i32, %arg3: memref<3xi32, #tpu.memory_space<smem>>, %arg4: memref<3xi32, #tpu.memory_space<smem>>) -> (i32, i32, i32) {
    %0 = arith.index_cast %arg0 : i32 to index
    %1 = memref.load %arg4[%0] : memref<3xi32, #tpu.memory_space<smem>>
    %c0_i32 = arith.constant 0 : i32
    %c0_i32_0 = arith.constant 0 : i32
    return %1, %arg2, %c0_i32 : i32, i32, i32
  }
  func.func @transform_4(%arg0: i32, %arg1: i32, %arg2: i32, %arg3: memref<3xi32, #tpu.memory_space<smem>>, %arg4: memref<3xi32, #tpu.memory_space<smem>>) -> (i32, i32, i32) {
    %0 = arith.index_cast %arg0 : i32 to index
    %1 = memref.load %arg3[%0] : memref<3xi32, #tpu.memory_space<smem>>
    %c0_i32 = arith.constant 0 : i32
    %c0_i32_0 = arith.constant 0 : i32
    return %1, %arg1, %c0_i32 : i32, i32, i32
  }
  func.func @transform_5(%arg0: i32, %arg1: i32, %arg2: i32, %arg3: memref<3xi32, #tpu.memory_space<smem>>, %arg4: memref<3xi32, #tpu.memory_space<smem>>) -> (i32, i32, i32) {
    %0 = arith.index_cast %arg0 : i32 to index
    %1 = memref.load %arg4[%0] : memref<3xi32, #tpu.memory_space<smem>>
    %c0_i32 = arith.constant 0 : i32
    %c0_i32_0 = arith.constant 0 : i32
    return %1, %c0_i32, %arg2 : i32, i32, i32
  }
  func.func @transform_6(%arg0: i32, %arg1: i32, %arg2: i32, %arg3: memref<3xi32, #tpu.memory_space<smem>>, %arg4: memref<3xi32, #tpu.memory_space<smem>>) -> (i32, i32, i32) {
    %c0_i32 = arith.constant 0 : i32
    %c0_i32_0 = arith.constant 0 : i32
    %c0_i32_1 = arith.constant 0 : i32
    return %arg0, %c0_i32, %c0_i32_0 : i32, i32, i32
  }
}

</mosaic_0001>

<llo_original>
// kernel: _sim_align_pallas.2
$region0: #{_sim_align_pallas.2}
  #allocation0 [shape = 'u32[]', space=smem, size = 0x4, offset = 0x4, fixed_abs, tag = 'smem constant byte address 0x4 - core index']
  #allocation1 [shape = 'u32[144,128]{1,0:T(1,128)}', space=vmem, size = 0x12000, scoped, tag = 'internal scratch']
  %s0 = inlined_call_operand.vmem [shape: f32[3,128,128], index: 0, kind: input, shape index: {}]
  %s1 = inlined_call_operand.vmem [shape: bf16[3,128,128], index: 1, kind: output, shape index: {}]
  %s2 = sld [smem:[#allocation0]]
  $region37: #{_sim_align_pallas.2} parent=0
    _
  %s4 = ssub.s32 1, %s2
  %s5 = scalar_select 0, %s4, %s2
  loop: start=0, step=1, limit=5
  $region2: #{_sim_align_pallas.2} parent=0 // loop_pre_header
    _
  $region3: #{_sim_align_pallas.2} parent=0 // loop_header
    %s7 = sphi 0, %s11
    %p8 = scmp.ge.s32.totalorder %s7, 5
    %s14 = sphi 0, %s26
    %s15 = sphi 0, %s22
    %s16 = sphi 0, %s14
    %s17 = sphi 0, %s15
    %s18 = sphi 0, %s16
    %s19 = sphi 0, %s17
    %s31 = sphi 0, %s33
    %s34 = sphi 0, %s31
    %s35 = sphi 0, %s34
    %s51 = sphi 0, %s35
    %s59 = sphi 0, %s61
    %s62 = sphi 0, %s59
    %s63 = sphi 0, %s62
    %s79 = sphi 0, %s63
  $region4: #{_sim_align_pallas.2} parent=0 // loop_header_branch
    %10 = sbr.rel (%p8) target = $region8
  $region5: #{_sim_align_pallas.2} parent=0 // loop_body
    %s12 = ssub.s32 %s7, 1
    %s13 = ssub.s32 %s7, 2
    %s20 = sadd.s32 1, %s15
    %p21 = scmp.ge.s32.totalorder %s20, 1
    %s22 = scalar_select %p21, 0, %s20
    %s23 = sadd.s32 1, %s14
    %s24 = scalar_select %p21, %s23, %s14
    %p25 = scmp.ge.s32.totalorder %s24, 3
    %s26 = scalar_select %p25, 0, %s24
    %s27 = ssub.s32 %s14, %s26
    %s28 = ssub.s32 %s15, %s22
    %s29 = sor.u32 %s27, %s28
    %p30 = scmp.eq.s32.totalorder %s29, 0
    %s32 = sadd.s32 %s31, 1
    %s33 = scalar_select %p30, %s31, %s32
    %p36 = pneg %p30
    %p37 = scmp.eq.s32.totalorder %s7, 2
    %p38 = por %p36, %p37
    %p39 = scmp.ne.s32.totalorder %s31, %s34
    %p40 = scmp.eq.s32.totalorder %s7, 0
    %p41 = por %p39, %p40
    %p42 = scmp.ne.s32.totalorder %s31, %s34
    %p43 = scmp.eq.s32.totalorder %s12, 2
    %p44 = por %p42, %p43
    %p45 = scmp.ne.s32.totalorder %s34, %s35
    %p46 = scmp.eq.s32.totalorder %s12, 0
    %p47 = por %p45, %p46
    %p48 = scmp.ne.s32.totalorder %s34, %s35
    %p49 = scmp.eq.s32.totalorder %s13, 2
    %p50 = por %p48, %p49
    %p52 = scmp.ne.s32.totalorder %s35, %s51
    %p53 = scmp.eq.s32.totalorder %s13, 0
    %p54 = por %p52, %p53
    %s55 = ssub.s32 %s14, %s26
    %s56 = ssub.s32 %s15, %s22
    %s57 = sor.u32 %s55, %s56
    %p58 = scmp.eq.s32.totalorder %s57, 0
    %s60 = sadd.s32 %s59, 1
    %s61 = scalar_select %p58, %s59, %s60
    %p64 = pneg %p58
    %p65 = scmp.eq.s32.totalorder %s7, 2
    %p66 = por %p64, %p65
    %p67 = scmp.ne.s32.totalorder %s59, %s62
    %p68 = scmp.eq.s32.totalorder %s7, 0
    %p69 = por %p67, %p68
    %p70 = scmp.ne.s32.totalorder %s59, %s62
    %p71 = scmp.eq.s32.totalorder %s12, 2
    %p72 = por %p70, %p71
    %p73 = scmp.ne.s32.totalorder %s62, %s63
    %p74 = scmp.eq.s32.totalorder %s12, 0
    %p75 = por %p73, %p74
    %p76 = scmp.ne.s32.totalorder %s62, %s63
    %p77 = scmp.eq.s32.totalorder %s13, 2
    %p78 = por %p76, %p77
    %p80 = scmp.ne.s32.totalorder %s63, %s79
    %p81 = scmp.eq.s32.totalorder %s13, 0
    %p82 = por %p80, %p81
    %p83 = scmp.le.s32.totalorder 1, %s7
    %p84 = scmp.lt.s32.totalorder %s7, 4
    %p85 = pnand %p83, %p84
    %p86 = pneg %p85
    // Predicated region
    $region9: #{_sim_align_pallas.2} parent=5 // pred_check
      _
    $region10: #{_sim_align_pallas.2} parent=5 // pred_check_branch
      %88 = sbr.rel (%p85) target = $region12
    $region11: #{_sim_align_pallas.2} parent=5 // pred_region
      %s89 = ssub.s32 %s7, 1
    $region12: #{_sim_align_pallas.2} parent=5 // pred_fallthru
      _
    %p90 = scmp.lt.s32.totalorder %s7, 3
    // Predicated region
    $region13: #{_sim_align_pallas.2} parent=5 // pred_check
      %p91 = pneg %p90
    $region14: #{_sim_align_pallas.2} parent=5 // pred_check_branch
      %93 = sbr.rel (%p91) target = $region16
    $region15: #{_sim_align_pallas.2} parent=5 // pred_region
      // Predicated region
      $region17: #{_sim_align_pallas.2} parent=15 // pred_check
        %p94 = pneg %p41
      $region18: #{_sim_align_pallas.2} parent=15 // pred_check_branch
        %96 = sbr.rel (%p94) target = $region20
      $region19: #{_sim_align_pallas.2} parent=15 // pred_region
        %s97 = smul.u32 16, %s15
        %p98 = scmp.lt.s32.totalorder %s14, 2
        %s99 = scalar_select %p98, %s14, 2
        %p100 = scmp.lt.s32.totalorder %s97, 15
        %s101 = scalar_select %p100, %s97, 15
        %s102 = smul.addr %s99, 16
        %s103 = sadd.s32 %s101, %s102
        %s104 = smul.addr %s103, 8
        %s105 = scalar_lea.vmem %s0, %s104
        %s106 = smul.u32 16, %s15
      $region20: #{_sim_align_pallas.2} parent=15 // pred_fallthru
        _
    $region16: #{_sim_align_pallas.2} parent=5 // pred_fallthru
      _
    %p107 = scmp.le.s32.totalorder 1, %s7
    %p108 = scmp.lt.s32.totalorder %s7, 4
    %p109 = pnand %p107, %p108
    %p110 = pneg %p109
    // Predicated region
    $region21: #{_sim_align_pallas.2} parent=5 // pred_check
      _
    $region22: #{_sim_align_pallas.2} parent=5 // pred_check_branch
      %112 = sbr.rel (%p109) target = $region24
    $region23: #{_sim_align_pallas.2} parent=5 // pred_region
      %s113 = ssub.s32 %s7, 1
      %s114 = smul.u32 16, %s17
      %p115 = scmp.lt.s32.totalorder %s16, 2
      %s116 = scalar_select %p115, %s16, 2
      %p117 = scmp.lt.s32.totalorder %s114, 15
      %s118 = scalar_select %p117, %s114, 15
      %s119 = smul.addr %s116, 16
      %s120 = sadd.s32 %s118, %s119
      %s121 = smul.addr %s120, 8
      %s122 = scalar_lea.vmem %s0, %s121
      %p123 = pneg %p47
      %p124 = pneg %p44
      %p125 = pneg %p75
      %p126 = pneg %p72
      %s127 = smul.u32 16, %s17
      %p128 = scmp.lt.s32.totalorder %s16, 2
      %s129 = scalar_select %p128, %s16, 2
      %p130 = scmp.lt.s32.totalorder %s127, 15
      %s131 = scalar_select %p130, %s127, 15
      %s132 = smul.addr %s129, 16
      %s133 = sadd.s32 %s131, %s132
      %s134 = smul.addr %s133, 4
      %s135 = scalar_lea.vmem %s1, %s134
      %s136 = smul.u32 16, %s17
      %p137 = scmp.lt.s32.totalorder %s16, 2
      %s138 = scalar_select %p137, %s16, 2
      %p139 = scmp.lt.s32.totalorder %s136, 15
      %s140 = scalar_select %p139, %s136, 15
      %s141 = smul.addr %s138, 16
      %s142 = sadd.s32 %s140, %s141
      %s143 = smul.addr %s142, 8
      %s144 = scalar_lea.vmem %s0, %s143
      %s145 = smul.u32 16, %s17
      %s146 = smul.u32 16, %s17
      %p147 = scmp.lt.s32.totalorder %s16, 2
      %s148 = scalar_select %p147, %s16, 2
      %p149 = scmp.lt.s32.totalorder %s146, 15
      %s150 = scalar_select %p149, %s146, 15
      %s151 = smul.addr %s148, 16
      %s152 = sadd.s32 %s150, %s151
      %s153 = smul.addr %s152, 4
      %s154 = scalar_lea.vmem %s1, %s153
      %s155 = smul.u32 16, %s17
      %v156 = vld [vmem:[%s144] sm:$0xff]
      %v157 = vld [vmem:[%s144 + $0x8] sm:$0xff]
      %v158 = vld [vmem:[%s144 + $0x10] sm:$0xff]
      %v159 = vld [vmem:[%s144 + $0x18] sm:$0xff]
      %v160 = vld [vmem:[%s144 + $0x20] sm:$0xff]
      %v161 = vld [vmem:[%s144 + $0x28] sm:$0xff]
      %v162 = vld [vmem:[%s144 + $0x30] sm:$0xff]
      %v163 = vld [vmem:[%s144 + $0x38] sm:$0xff]
      %v164 = vld [vmem:[%s144 + $0x40] sm:$0xff]
      %v165 = vld [vmem:[%s144 + $0x48] sm:$0xff]
      %v166 = vld [vmem:[%s144 + $0x50] sm:$0xff]
      %v167 = vld [vmem:[%s144 + $0x58] sm:$0xff]
      %v168 = vld [vmem:[%s144 + $0x60] sm:$0xff]
      %v169 = vld [vmem:[%s144 + $0x68] sm:$0xff]
      %v170 = vld [vmem:[%s144 + $0x70] sm:$0xff]
      %v171 = vld [vmem:[%s144 + $0x78] sm:$0xff]
      %v172 = vmul.f32 %v156, %v156
      %v173 = vmul.f32 %v157, %v157
      %v174 = vmul.f32 %v158, %v158
      %v175 = vmul.f32 %v159, %v159
      %v176 = vmul.f32 %v160, %v160
      %v177 = vmul.f32 %v161, %v161
      %v178 = vmul.f32 %v162, %v162
      %v179 = vmul.f32 %v163, %v163
      %v180 = vmul.f32 %v164, %v164
      %v181 = vmul.f32 %v165, %v165
      %v182 = vmul.f32 %v166, %v166
      %v183 = vmul.f32 %v167, %v167
      %v184 = vmul.f32 %v168, %v168
      %v185 = vmul.f32 %v169, %v169
      %v186 = vmul.f32 %v170, %v170
      %v187 = vmul.f32 %v171, %v171
      %188 = vadd.xlane.f32.xlu0 %v172
      %v189 = vpop.xlane.xlu0 %188
      %190 = vadd.xlane.f32.xlu0 %v173
      %v191 = vpop.xlane.xlu0 %190
      %192 = vadd.xlane.f32.xlu0 %v174
      %v193 = vpop.xlane.xlu0 %192
      %194 = vadd.xlane.f32.xlu0 %v175
      %v195 = vpop.xlane.xlu0 %194
      %196 = vadd.xlane.f32.xlu0 %v176
      %v197 = vpop.xlane.xlu0 %196
      %198 = vadd.xlane.f32.xlu0 %v177
      %v199 = vpop.xlane.xlu0 %198
      %200 = vadd.xlane.f32.xlu0 %v178
      %v201 = vpop.xlane.xlu0 %200
      %202 = vadd.xlane.f32.xlu0 %v179
      %v203 = vpop.xlane.xlu0 %202
      %204 = vadd.xlane.f32.xlu0 %v180
      %v205 = vpop.xlane.xlu0 %204
      %206 = vadd.xlane.f32.xlu0 %v181
      %v207 = vpop.xlane.xlu0 %206
      %208 = vadd.xlane.f32.xlu0 %v182
      %v209 = vpop.xlane.xlu0 %208
      %210 = vadd.xlane.f32.xlu0 %v183
      %v211 = vpop.xlane.xlu0 %210
      %212 = vadd.xlane.f32.xlu0 %v184
      %v213 = vpop.xlane.xlu0 %212
      %214 = vadd.xlane.f32.xlu0 %v185
      %v215 = vpop.xlane.xlu0 %214
      %216 = vadd.xlane.f32.xlu0 %v186
      %v217 = vpop.xlane.xlu0 %216
      %218 = vadd.xlane.f32.xlu0 %v187
      %v219 = vpop.xlane.xlu0 %218
      %v220 = vmax.f32 %v189, 1e-24
      %v221 = vmax.f32 %v191, 1e-24
      %v222 = vmax.f32 %v193, 1e-24
      %v223 = vmax.f32 %v195, 1e-24
      %v224 = vmax.f32 %v197, 1e-24
      %v225 = vmax.f32 %v199, 1e-24
      %v226 = vmax.f32 %v201, 1e-24
      %v227 = vmax.f32 %v203, 1e-24
      %v228 = vmax.f32 %v205, 1e-24
      %v229 = vmax.f32 %v207, 1e-24
      %v230 = vmax.f32 %v209, 1e-24
      %v231 = vmax.f32 %v211, 1e-24
      %v232 = vmax.f32 %v213, 1e-24
      %v233 = vmax.f32 %v215, 1e-24
      %v234 = vmax.f32 %v217, 1e-24
      %v235 = vmax.f32 %v219, 1e-24
      %v236 = vrsqrt.pop %v220
      %v237 = vrsqrt.pop %v221
      %v238 = vrsqrt.pop %v222
      %v239 = vrsqrt.pop %v223
      %v240 = vrsqrt.pop %v224
      %v241 = vrsqrt.pop %v225
      %v242 = vrsqrt.pop %v226
      %v243 = vrsqrt.pop %v227
      %v244 = vrsqrt.pop %v228
      %v245 = vrsqrt.pop %v229
      %v246 = vrsqrt.pop %v230
      %v247 = vrsqrt.pop %v231
      %v248 = vrsqrt.pop %v232
      %v249 = vrsqrt.pop %v233
      %v250 = vrsqrt.pop %v234
      %v251 = vrsqrt.pop %v235
      %v252 = vmul.f32 %v156, %v236
      %v253 = vmul.f32 %v157, %v237
      %v254 = vmul.f32 %v158, %v238
      %v255 = vmul.f32 %v159, %v239
      %v256 = vmul.f32 %v160, %v240
      %v257 = vmul.f32 %v161, %v241
      %v258 = vmul.f32 %v162, %v242
      %v259 = vmul.f32 %v163, %v243
      %v260 = vmul.f32 %v164, %v244
      %v261 = vmul.f32 %v165, %v245
      %v262 = vmul.f32 %v166, %v246
      %v263 = vmul.f32 %v167, %v247
      %v264 = vmul.f32 %v168, %v248
      %v265 = vmul.f32 %v169, %v249
      %v266 = vmul.f32 %v170, %v250
      %v267 = vmul.f32 %v171, %v251
      %v268 = vpack.c.bf16 %v253, %v252
      %v269 = vpack.c.bf16 %v255, %v254
      %v270 = vpack.c.bf16 %v257, %v256
      %v271 = vpack.c.bf16 %v259, %v258
      %v272 = vpack.c.bf16 %v261, %v260
      %v273 = vpack.c.bf16 %v263, %v262
      %v274 = vpack.c.bf16 %v265, %v264
      %v275 = vpack.c.bf16 %v267, %v266
      %v284 = vunpack.c.l.b16 %v268
      %v285 = vunpack.c.h.b16 %v268
      %v286 = vunpack.c.l.b16 %v269
      %v287 = vunpack.c.h.b16 %v269
      %v288 = vunpack.c.l.b16 %v270
      %v289 = vunpack.c.h.b16 %v270
      %v290 = vunpack.c.l.b16 %v271
      %v291 = vunpack.c.h.b16 %v271
      %v292 = vunpack.c.l.b16 %v272
      %v293 = vunpack.c.h.b16 %v272
      %v294 = vunpack.c.l.b16 %v273
      %v295 = vunpack.c.h.b16 %v273
      %v296 = vunpack.c.l.b16 %v274
      %v297 = vunpack.c.h.b16 %v274
      %v298 = vunpack.c.l.b16 %v275
      %v299 = vunpack.c.h.b16 %v275
      %v300 = vpack.c.b16 %v284, %v284
      %v301 = vpack.c.b16 %v285, %v285
      %v302 = vpack.c.b16 %v286, %v286
      %v303 = vpack.c.b16 %v287, %v287
      %v304 = vpack.c.b16 %v288, %v288
      %v305 = vpack.c.b16 %v289, %v289
      %v306 = vpack.c.b16 %v290, %v290
      %v307 = vpack.c.b16 %v291, %v291
      %v308 = vpack.c.b16 %v292, %v292
      %v309 = vpack.c.b16 %v293, %v293
      %v310 = vpack.c.b16 %v294, %v294
      %v311 = vpack.c.b16 %v295, %v295
      %v312 = vpack.c.b16 %v296, %v296
      %v313 = vpack.c.b16 %v297, %v297
      %v314 = vpack.c.b16 %v298, %v298
      %v315 = vpack.c.b16 %v299, %v299
      %332 = vst [vmem:[%s154] sm:$0xf] %v300
      %333 = vst [vmem:[%s154 + $0x4] sm:$0xf] %v301
      %334 = vst [vmem:[%s154 + $0x8] sm:$0xf] %v302
      %335 = vst [vmem:[%s154 + $0xc] sm:$0xf] %v303
      %336 = vst [vmem:[%s154 + $0x10] sm:$0xf] %v304
      %337 = vst [vmem:[%s154 + $0x14] sm:$0xf] %v305
      %338 = vst [vmem:[%s154 + $0x18] sm:$0xf] %v306
      %339 = vst [vmem:[%s154 + $0x1c] sm:$0xf] %v307
      %340 = vst [vmem:[%s154 + $0x20] sm:$0xf] %v308
      %341 = vst [vmem:[%s154 + $0x24] sm:$0xf] %v309
      %342 = vst [vmem:[%s154 + $0x28] sm:$0xf] %v310
      %343 = vst [vmem:[%s154 + $0x2c] sm:$0xf] %v311
      %344 = vst [vmem:[%s154 + $0x30] sm:$0xf] %v312
      %345 = vst [vmem:[%s154 + $0x34] sm:$0xf] %v313
      %346 = vst [vmem:[%s154 + $0x38] sm:$0xf] %v314
      %347 = vst [vmem:[%s154 + $0x3c] sm:$0xf] %v315
      %s348 = smul.u32 16, %s17
      %p349 = scmp.lt.s32.totalorder %s16, 2
      %s350 = scalar_select %p349, %s16, 2
      %p351 = scmp.lt.s32.totalorder %s348, 15
      %s352 = scalar_select %p351, %s348, 15
      %s353 = smul.addr %s350, 16
      %s354 = sadd.s32 %s352, %s353
      %s355 = smul.addr %s354, 4
      %s356 = scalar_lea.vmem %s1, %s355
      // Predicated region
      $region25: #{_sim_align_pallas.2} parent=23 // pred_check
        %p357 = pneg %p72
      $region26: #{_sim_align_pallas.2} parent=23 // pred_check_branch
        %359 = sbr.rel (%p357) target = $region28
      $region27: #{_sim_align_pallas.2} parent=23 // pred_region
        %s360 = smul.u32 16, %s17
      $region28: #{_sim_align_pallas.2} parent=23 // pred_fallthru
        _
    $region24: #{_sim_align_pallas.2} parent=5 // pred_fallthru
      _
    %p361 = scmp.le.s32.totalorder 2, %s7
    // Predicated region
    $region29: #{_sim_align_pallas.2} parent=5 // pred_check
      %p362 = pneg %p361
    $region30: #{_sim_align_pallas.2} parent=5 // pred_check_branch
      %364 = sbr.rel (%p362) target = $region32
    $region31: #{_sim_align_pallas.2} parent=5 // pred_region
      %s365 = ssub.s32 %s7, 2
      // Predicated region
      $region33: #{_sim_align_pallas.2} parent=31 // pred_check
        %p366 = pneg %p78
      $region34: #{_sim_align_pallas.2} parent=31 // pred_check_branch
        %368 = sbr.rel (%p366) target = $region36
      $region35: #{_sim_align_pallas.2} parent=31 // pred_region
        %s369 = smul.u32 16, %s19
        %p370 = scmp.lt.s32.totalorder %s18, 2
        %s371 = scalar_select %p370, %s18, 2
        %p372 = scmp.lt.s32.totalorder %s369, 15
        %s373 = scalar_select %p372, %s369, 15
        %s374 = smul.addr %s371, 16
        %s375 = sadd.s32 %s373, %s374
        %s376 = smul.addr %s375, 4
        %s377 = scalar_lea.vmem %s1, %s376
      $region36: #{_sim_align_pallas.2} parent=31 // pred_fallthru
        _
    $region32: #{_sim_align_pallas.2} parent=5 // pred_fallthru
      _
  $region6: #{_sim_align_pallas.2} parent=0 // loop_footer
    %s11 = sadd.s32 1, %s7
  $region7: #{_sim_align_pallas.2} parent=0 // loop_footer_branch
    %6 = sbr.rel target = $region3
  $region8: #{_sim_align_pallas.2} parent=0 // loop_exit
    _

// kernel: _sim_align_pallas.3
$region0: #{_sim_align_pallas.3}
  #allocation0 [shape = 'u32[]', space=smem, size = 0x4, offset = 0x4, fixed_abs, tag = 'smem constant byte address 0x4 - core index']
  #allocation1 [shape = 'u32[144,128]{1,0:T(1,128)}', space=vmem, size = 0x12000, scoped, tag = 'internal scratch']
  #allocation2 [shape = 'f32[1,128]{1,0:T(1,128)}', space=vmem, size = 0x200, scoped, tag = 'scratch operand']
  #allocation3 [shape = 's32[1]{0}', space=sflag, size = 0x4, scoped, tag = 'scoped memory for _sim_align_pallas.3']
  #allocation4 [shape = 'u8[512]{0}', space=smem, size = 0x200, scoped, tag = 'prefetched SMEM operand 0']
  #allocation5 [shape = 'u8[512]{0}', space=smem, size = 0x200, scoped, tag = 'prefetched SMEM operand 1']
  %s0 = inlined_call_operand.vmem [shape: s32[3], index: 0, kind: input, shape index: {}]
  %s1 = inlined_call_operand.vmem [shape: s32[3], index: 1, kind: input, shape index: {}]
  %s2 = inlined_call_operand.vmem [shape: bf16[3,128,128], index: 2, kind: input, shape index: {}, may-alias: {2,3,4,5}]
  %s3 = inlined_call_operand.vmem [shape: bf16[3,128,128], index: 3, kind: input, shape index: {}, may-alias: {2,3,4,5}]
  %s4 = inlined_call_operand.vmem [shape: bf16[3,128,128], index: 4, kind: input, shape index: {}, may-alias: {2,3,4,5}]
  %s5 = inlined_call_operand.vmem [shape: bf16[3,128,128], index: 5, kind: input, shape index: {}, may-alias: {2,3,4,5}]
  %s6 = inlined_call_operand.vmem [shape: f32[3,128,1], index: 6, kind: input, shape index: {}]
  %s7 = inlined_call_operand.vmem [shape: f32[3,1,128], index: 7, kind: input, shape index: {}]
  %s8 = inlined_call_operand.vmem [shape: f32[3,1,128], index: 8, kind: output, shape index: {}]
  %s9 = sld [smem:[#allocation0]]
  $region65: #{_sim_align_pallas.3} parent=0
    _
  %s11 = ssub.s32 1, %s9
  %s12 = scalar_select 0, %s11, %s9
  %s13 = sshll.u32 %s0, 4
  %s14 = int_to_ptr.vmem [resolvable:$true] %s13
  %16 = dma.vmem_to_smem %s14, 16, [#allocation4], [#allocation3]
  %s17 = sshll.u32 %s1, 4
  %s18 = int_to_ptr.vmem [resolvable:$true] %s17
  %20 = dma.vmem_to_smem %s18, 16, [#allocation5], [#allocation3]
  %21 = dma.done [#allocation3], 32
  %22 = sfence
  loop: start=0, step=1, limit=5
  $region2: #{_sim_align_pallas.3} parent=0 // loop_pre_header
    _
  $region3: #{_sim_align_pallas.3} parent=0 // loop_header
    %s24 = sphi 0, %s28
    %p25 = scmp.ge.s32.totalorder %s24, 5
    %s31 = sphi 0, %s50
    %s32 = sphi 0, %s46
    %s33 = sphi 0, %s42
    %s34 = sphi 0, %s31
    %s35 = sphi 0, %s32
    %s36 = sphi 0, %s33
    %s37 = sphi 0, %s34
    %s38 = sphi 0, %s35
    %s39 = sphi 0, %s36
    %s57 = sphi 0, %s59
    %s60 = sphi 0, %s57
    %s61 = sphi 0, %s60
    %s77 = sphi 0, %s61
    %s87 = sphi 0, %s89
    %s90 = sphi 0, %s87
    %s91 = sphi 0, %s90
    %s107 = sphi 0, %s91
    %s117 = sphi 0, %s119
    %s120 = sphi 0, %s117
    %s121 = sphi 0, %s120
    %s137 = sphi 0, %s121
    %s147 = sphi 0, %s149
    %s150 = sphi 0, %s147
    %s151 = sphi 0, %s150
    %s167 = sphi 0, %s151
    %s177 = sphi 0, %s179
    %s180 = sphi 0, %s177
    %s181 = sphi 0, %s180
    %s197 = sphi 0, %s181
    %s207 = sphi 0, %s209
    %s210 = sphi 0, %s207
    %s211 = sphi 0, %s210
    %s227 = sphi 0, %s211
    %s233 = sphi 0, %s235
    %s236 = sphi 0, %s233
    %s237 = sphi 0, %s236
    %s253 = sphi 0, %s237
  $region4: #{_sim_align_pallas.3} parent=0 // loop_header_branch
    %27 = sbr.rel (%p25) target = $region8
  $region5: #{_sim_align_pallas.3} parent=0 // loop_body
    %s29 = ssub.s32 %s24, 1
    %s30 = ssub.s32 %s24, 2
    %s40 = sadd.s32 1, %s33
    %p41 = scmp.ge.s32.totalorder %s40, 1
    %s42 = scalar_select %p41, 0, %s40
    %s43 = sadd.s32 1, %s32
    %s44 = scalar_select %p41, %s43, %s32
    %p45 = scmp.ge.s32.totalorder %s44, 1
    %s46 = scalar_select %p45, 0, %s44
    %s47 = sadd.s32 1, %s31
    %s48 = scalar_select %p45, %s47, %s31
    %p49 = scmp.ge.s32.totalorder %s48, 3
    %s50 = scalar_select %p49, 0, %s48
    %s51 = sld [smem:[#allocation4 + %s31]]
    %s52 = sld [smem:[#allocation4 + %s50]]
    %s53 = ssub.s32 %s51, %s52
    %s54 = ssub.s32 %s32, %s46
    %s55 = sor.u32 %s53, %s54
    %p56 = scmp.eq.s32.totalorder %s55, 0
    %s58 = sadd.s32 %s57, 1
    %s59 = scalar_select %p56, %s57, %s58
    %p62 = pneg %p56
    %p63 = scmp.eq.s32.totalorder %s24, 2
    %p64 = por %p62, %p63
    %p65 = scmp.ne.s32.totalorder %s57, %s60
    %p66 = scmp.eq.s32.totalorder %s24, 0
    %p67 = por %p65, %p66
    %p68 = scmp.ne.s32.totalorder %s57, %s60
    %p69 = scmp.eq.s32.totalorder %s29, 2
    %p70 = por %p68, %p69
    %p71 = scmp.ne.s32.totalorder %s60, %s61
    %p72 = scmp.eq.s32.totalorder %s29, 0
    %p73 = por %p71, %p72
    %p74 = scmp.ne.s32.totalorder %s60, %s61
    %p75 = scmp.eq.s32.totalorder %s30, 2
    %p76 = por %p74, %p75
    %p78 = scmp.ne.s32.totalorder %s61, %s77
    %p79 = scmp.eq.s32.totalorder %s30, 0
    %p80 = por %p78, %p79
    %s81 = sld [smem:[#allocation4 + %s31]]
    %s82 = sld [smem:[#allocation4 + %s50]]
    %s83 = ssub.s32 %s81, %s82
    %s84 = ssub.s32 %s33, %s42
    %s85 = sor.u32 %s83, %s84
    %p86 = scmp.eq.s32.totalorder %s85, 0
    %s88 = sadd.s32 %s87, 1
    %s89 = scalar_select %p86, %s87, %s88
    %p92 = pneg %p86
    %p93 = scmp.eq.s32.totalorder %s24, 2
    %p94 = por %p92, %p93
    %p95 = scmp.ne.s32.totalorder %s87, %s90
    %p96 = scmp.eq.s32.totalorder %s24, 0
    %p97 = por %p95, %p96
    %p98 = scmp.ne.s32.totalorder %s87, %s90
    %p99 = scmp.eq.s32.totalorder %s29, 2
    %p100 = por %p98, %p99
    %p101 = scmp.ne.s32.totalorder %s90, %s91
    %p102 = scmp.eq.s32.totalorder %s29, 0
    %p103 = por %p101, %p102
    %p104 = scmp.ne.s32.totalorder %s90, %s91
    %p105 = scmp.eq.s32.totalorder %s30, 2
    %p106 = por %p104, %p105
    %p108 = scmp.ne.s32.totalorder %s91, %s107
    %p109 = scmp.eq.s32.totalorder %s30, 0
    %p110 = por %p108, %p109
    %s111 = sld [smem:[#allocation5 + %s31]]
    %s112 = sld [smem:[#allocation5 + %s50]]
    %s113 = ssub.s32 %s111, %s112
    %s114 = ssub.s32 %s32, %s46
    %s115 = sor.u32 %s113, %s114
    %p116 = scmp.eq.s32.totalorder %s115, 0
    %s118 = sadd.s32 %s117, 1
    %s119 = scalar_select %p116, %s117, %s118
    %p122 = pneg %p116
    %p123 = scmp.eq.s32.totalorder %s24, 2
    %p124 = por %p122, %p123
    %p125 = scmp.ne.s32.totalorder %s117, %s120
    %p126 = scmp.eq.s32.totalorder %s24, 0
    %p127 = por %p125, %p126
    %p128 = scmp.ne.s32.totalorder %s117, %s120
    %p129 = scmp.eq.s32.totalorder %s29, 2
    %p130 = por %p128, %p129
    %p131 = scmp.ne.s32.totalorder %s120, %s121
    %p132 = scmp.eq.s32.totalorder %s29, 0
    %p133 = por %p131, %p132
    %p134 = scmp.ne.s32.totalorder %s120, %s121
    %p135 = scmp.eq.s32.totalorder %s30, 2
    %p136 = por %p134, %p135
    %p138 = scmp.ne.s32.totalorder %s121, %s137
    %p139 = scmp.eq.s32.totalorder %s30, 0
    %p140 = por %p138, %p139
    %s141 = sld [smem:[#allocation5 + %s31]]
    %s142 = sld [smem:[#allocation5 + %s50]]
    %s143 = ssub.s32 %s141, %s142
    %s144 = ssub.s32 %s33, %s42
    %s145 = sor.u32 %s143, %s144
    %p146 = scmp.eq.s32.totalorder %s145, 0
    %s148 = sadd.s32 %s147, 1
    %s149 = scalar_select %p146, %s147, %s148
    %p152 = pneg %p146
    %p153 = scmp.eq.s32.totalorder %s24, 2
    %p154 = por %p152, %p153
    %p155 = scmp.ne.s32.totalorder %s147, %s150
    %p156 = scmp.eq.s32.totalorder %s24, 0
    %p157 = por %p155, %p156
    %p158 = scmp.ne.s32.totalorder %s147, %s150
    %p159 = scmp.eq.s32.totalorder %s29, 2
    %p160 = por %p158, %p159
    %p161 = scmp.ne.s32.totalorder %s150, %s151
    %p162 = scmp.eq.s32.totalorder %s29, 0
    %p163 = por %p161, %p162
    %p164 = scmp.ne.s32.totalorder %s150, %s151
    %p165 = scmp.eq.s32.totalorder %s30, 2
    %p166 = por %p164, %p165
    %p168 = scmp.ne.s32.totalorder %s151, %s167
    %p169 = scmp.eq.s32.totalorder %s30, 0
    %p170 = por %p168, %p169
    %s171 = sld [smem:[#allocation4 + %s31]]
    %s172 = sld [smem:[#allocation4 + %s50]]
    %s173 = ssub.s32 %s171, %s172
    %s174 = ssub.s32 %s32, %s46
    %s175 = sor.u32 %s173, %s174
    %p176 = scmp.eq.s32.totalorder %s175, 0
    %s178 = sadd.s32 %s177, 1
    %s179 = scalar_select %p176, %s177, %s178
    %p182 = pneg %p176
    %p183 = scmp.eq.s32.totalorder %s24, 2
    %p184 = por %p182, %p183
    %p185 = scmp.ne.s32.totalorder %s177, %s180
    %p186 = scmp.eq.s32.totalorder %s24, 0
    %p187 = por %p185, %p186
    %p188 = scmp.ne.s32.totalorder %s177, %s180
    %p189 = scmp.eq.s32.totalorder %s29, 2
    %p190 = por %p188, %p189
    %p191 = scmp.ne.s32.totalorder %s180, %s181
    %p192 = scmp.eq.s32.totalorder %s29, 0
    %p193 = por %p191, %p192
    %p194 = scmp.ne.s32.totalorder %s180, %s181
    %p195 = scmp.eq.s32.totalorder %s30, 2
    %p196 = por %p194, %p195
    %p198 = scmp.ne.s32.totalorder %s181, %s197
    %p199 = scmp.eq.s32.totalorder %s30, 0
    %p200 = por %p198, %p199
    %s201 = sld [smem:[#allocation5 + %s31]]
    %s202 = sld [smem:[#allocation5 + %s50]]
    %s203 = ssub.s32 %s201, %s202
    %s204 = ssub.s32 %s33, %s42
    %s205 = sor.u32 %s203, %s204
    %p206 = scmp.eq.s32.totalorder %s205, 0
    %s208 = sadd.s32 %s207, 1
    %s209 = scalar_select %p206, %s207, %s208
    %p212 = pneg %p206
    %p213 = scmp.eq.s32.totalorder %s24, 2
    %p214 = por %p212, %p213
    %p215 = scmp.ne.s32.totalorder %s207, %s210
    %p216 = scmp.eq.s32.totalorder %s24, 0
    %p217 = por %p215, %p216
    %p218 = scmp.ne.s32.totalorder %s207, %s210
    %p219 = scmp.eq.s32.totalorder %s29, 2
    %p220 = por %p218, %p219
    %p221 = scmp.ne.s32.totalorder %s210, %s211
    %p222 = scmp.eq.s32.totalorder %s29, 0
    %p223 = por %p221, %p222
    %p224 = scmp.ne.s32.totalorder %s210, %s211
    %p225 = scmp.eq.s32.totalorder %s30, 2
    %p226 = por %p224, %p225
    %p228 = scmp.ne.s32.totalorder %s211, %s227
    %p229 = scmp.eq.s32.totalorder %s30, 0
    %p230 = por %p228, %p229
    %s231 = ssub.s32 %s31, %s50
    %p232 = scmp.eq.s32.totalorder %s231, 0
    %s234 = sadd.s32 %s233, 1
    %s235 = scalar_select %p232, %s233, %s234
    %p238 = pneg %p232
    %p239 = scmp.eq.s32.totalorder %s24, 2
    %p240 = por %p238, %p239
    %p241 = scmp.ne.s32.totalorder %s233, %s236
    %p242 = scmp.eq.s32.totalorder %s24, 0
    %p243 = por %p241, %p242
    %p244 = scmp.ne.s32.totalorder %s233, %s236
    %p245 = scmp.eq.s32.totalorder %s29, 2
    %p246 = por %p244, %p245
    %p247 = scmp.ne.s32.totalorder %s236, %s237
    %p248 = scmp.eq.s32.totalorder %s29, 0
    %p249 = por %p247, %p248
    %p250 = scmp.ne.s32.totalorder %s236, %s237
    %p251 = scmp.eq.s32.totalorder %s30, 2
    %p252 = por %p250, %p251
    %p254 = scmp.ne.s32.totalorder %s237, %s253
    %p255 = scmp.eq.s32.totalorder %s30, 0
    %p256 = por %p254, %p255
    %p257 = scmp.le.s32.totalorder 1, %s24
    %p258 = scmp.lt.s32.totalorder %s24, 4
    %p259 = pnand %p257, %p258
    %p260 = pneg %p259
    // Predicated region
    $region9: #{_sim_align_pallas.3} parent=5 // pred_check
      _
    $region10: #{_sim_align_pallas.3} parent=5 // pred_check_branch
      %262 = sbr.rel (%p259) target = $region12
    $region11: #{_sim_align_pallas.3} parent=5 // pred_region
      %s263 = ssub.s32 %s24, 1
    $region12: #{_sim_align_pallas.3} parent=5 // pred_fallthru
      _
    %p264 = scmp.lt.s32.totalorder %s24, 3
    // Predicated region
    $region13: #{_sim_align_pallas.3} parent=5 // pred_check
      %p265 = pneg %p264
    $region14: #{_sim_align_pallas.3} parent=5 // pred_check_branch
      %267 = sbr.rel (%p265) target = $region16
    $region15: #{_sim_align_pallas.3} parent=5 // pred_region
      // Predicated region
      $region17: #{_sim_align_pallas.3} parent=15 // pred_check
        %p268 = pneg %p67
      $region18: #{_sim_align_pallas.3} parent=15 // pred_check_branch
        %270 = sbr.rel (%p268) target = $region20
      $region19: #{_sim_align_pallas.3} parent=15 // pred_region
        %s271 = sld [smem:[#allocation4 + %s31]]
        %s272 = smul.u32 16, %s32
        %p273 = scmp.lt.s32.totalorder %s271, 2
        %s274 = scalar_select %p273, %s271, 2
        %p275 = scmp.lt.s32.totalorder %s272, 15
        %s276 = scalar_select %p275, %s272, 15
        %s277 = smul.addr %s274, 16
        %s278 = sadd.s32 %s276, %s277
        %s279 = smul.addr %s278, 4
        %s280 = scalar_lea.vmem %s2, %s279
        %s281 = sld [smem:[#allocation4 + %s31]]
        %s282 = smul.u32 16, %s32
      $region20: #{_sim_align_pallas.3} parent=15 // pred_fallthru
        _
      // Predicated region
      $region21: #{_sim_align_pallas.3} parent=15 // pred_check
        %p283 = pneg %p97
      $region22: #{_sim_align_pallas.3} parent=15 // pred_check_branch
        %285 = sbr.rel (%p283) target = $region24
      $region23: #{_sim_align_pallas.3} parent=15 // pred_region
        %s286 = sld [smem:[#allocation4 + %s31]]
        %s287 = smul.u32 16, %s33
        %p288 = scmp.lt.s32.totalorder %s286, 2
        %s289 = scalar_select %p288, %s286, 2
        %p290 = scmp.lt.s32.totalorder %s287, 15
        %s291 = scalar_select %p290, %s287, 15
        %s292 = smul.addr %s289, 16
        %s293 = sadd.s32 %s291, %s292
        %s294 = smul.addr %s293, 4
        %s295 = scalar_lea.vmem %s3, %s294
        %s296 = sld [smem:[#allocation4 + %s31]]
        %s297 = smul.u32 16, %s33
      $region24: #{_sim_align_pallas.3} parent=15 // pred_fallthru
        _
      // Predicated region
      $region25: #{_sim_align_pallas.3} parent=15 // pred_check
        %p298 = pneg %p127
      $region26: #{_sim_align_pallas.3} parent=15 // pred_check_branch
        %300 = sbr.rel (%p298) target = $region28
      $region27: #{_sim_align_pallas.3} parent=15 // pred_region
        %s301 = sld [smem:[#allocation5 + %s31]]
        %s302 = smul.u32 16, %s32
        %p303 = scmp.lt.s32.totalorder %s301, 2
        %s304 = scalar_select %p303, %s301, 2
        %p305 = scmp.lt.s32.totalorder %s302, 15
        %s306 = scalar_select %p305, %s302, 15
        %s307 = smul.addr %s304, 16
        %s308 = sadd.s32 %s306, %s307
        %s309 = smul.addr %s308, 4
        %s310 = scalar_lea.vmem %s4, %s309
        %s311 = sld [smem:[#allocation5 + %s31]]
        %s312 = smul.u32 16, %s32
      $region28: #{_sim_align_pallas.3} parent=15 // pred_fallthru
        _
      // Predicated region
      $region29: #{_sim_align_pallas.3} parent=15 // pred_check
        %p313 = pneg %p157
      $region30: #{_sim_align_pallas.3} parent=15 // pred_check_branch
        %315 = sbr.rel (%p313) target = $region32
      $region31: #{_sim_align_pallas.3} parent=15 // pred_region
        %s316 = sld [smem:[#allocation5 + %s31]]
        %s317 = smul.u32 16, %s33
        %p318 = scmp.lt.s32.totalorder %s316, 2
        %s319 = scalar_select %p318, %s316, 2
        %p320 = scmp.lt.s32.totalorder %s317, 15
        %s321 = scalar_select %p320, %s317, 15
        %s322 = smul.addr %s319, 16
        %s323 = sadd.s32 %s321, %s322
        %s324 = smul.addr %s323, 4
        %s325 = scalar_lea.vmem %s5, %s324
        %s326 = sld [smem:[#allocation5 + %s31]]
        %s327 = smul.u32 16, %s33
      $region32: #{_sim_align_pallas.3} parent=15 // pred_fallthru
        _
      // Predicated region
      $region33: #{_sim_align_pallas.3} parent=15 // pred_check
        %p328 = pneg %p187
      $region34: #{_sim_align_pallas.3} parent=15 // pred_check_branch
        %330 = sbr.rel (%p328) target = $region36
      $region35: #{_sim_align_pallas.3} parent=15 // pred_region
        %s331 = sld [smem:[#allocation4 + %s31]]
        %s332 = smul.u32 16, %s32
        %p333 = scmp.lt.s32.totalorder %s331, 2
        %s334 = scalar_select %p333, %s331, 2
        %p335 = scmp.lt.s32.totalorder %s332, 15
        %s336 = scalar_select %p335, %s332, 15
        %s337 = smul.addr %s334, 16
        %s338 = sadd.s32 %s336, %s337
        %s339 = smul.addr %s338, 8
        %s340 = scalar_lea.vmem %s6, %s339
        %s341 = sld [smem:[#allocation4 + %s31]]
        %s342 = smul.u32 16, %s32
      $region36: #{_sim_align_pallas.3} parent=15 // pred_fallthru
        _
      // Predicated region
      $region37: #{_sim_align_pallas.3} parent=15 // pred_check
        %p343 = pneg %p217
      $region38: #{_sim_align_pallas.3} parent=15 // pred_check_branch
        %345 = sbr.rel (%p343) target = $region40
      $region39: #{_sim_align_pallas.3} parent=15 // pred_region
        %s346 = sld [smem:[#allocation5 + %s31]]
        %p347 = scmp.lt.s32.totalorder %s346, 2
        %s348 = scalar_select %p347, %s346, 2
        %p349 = scmp.lt.s32.totalorder %s33, 0
        %s350 = scalar_select %p349, %s33, 0
        %s351 = sadd.s32 %s350, %s348
        %s352 = scalar_lea.vmem %s7, %s351
        %s353 = sld [smem:[#allocation5 + %s31]]
      $region40: #{_sim_align_pallas.3} parent=15 // pred_fallthru
        _
    $region16: #{_sim_align_pallas.3} parent=5 // pred_fallthru
      _
    %p354 = scmp.le.s32.totalorder 1, %s24
    %p355 = scmp.lt.s32.totalorder %s24, 4
    %p356 = pnand %p354, %p355
    %p357 = pneg %p356
    // Predicated region
    $region41: #{_sim_align_pallas.3} parent=5 // pred_check
      _
    $region42: #{_sim_align_pallas.3} parent=5 // pred_check_branch
      %359 = sbr.rel (%p356) target = $region44
    $region43: #{_sim_align_pallas.3} parent=5 // pred_region
      %s360 = ssub.s32 %s24, 1
      %s361 = sld [smem:[#allocation4 + %s34]]
      %s362 = smul.u32 16, %s35
      %p363 = scmp.lt.s32.totalorder %s361, 2
      %s364 = scalar_select %p363, %s361, 2
      %p365 = scmp.lt.s32.totalorder %s362, 15
      %s366 = scalar_select %p365, %s362, 15
      %s367 = smul.addr %s364, 16
      %s368 = sadd.s32 %s366, %s367
      %s369 = smul.addr %s368, 4
      %s370 = scalar_lea.vmem %s2, %s369
      %p371 = pneg %p73
      %p372 = pneg %p70
      %s373 = sld [smem:[#allocation4 + %s34]]
      %s374 = smul.u32 16, %s36
      %p375 = scmp.lt.s32.totalorder %s373, 2
      %s376 = scalar_select %p375, %s373, 2
      %p377 = scmp.lt.s32.totalorder %s374, 15
      %s378 = scalar_select %p377, %s374, 15
      %s379 = smul.addr %s376, 16
      %s380 = sadd.s32 %s378, %s379
      %s381 = smul.addr %s380, 4
      %s382 = scalar_lea.vmem %s3, %s381
      %p383 = pneg %p103
      %p384 = pneg %p100
      %s385 = sld [smem:[#allocation5 + %s34]]
      %s386 = smul.u32 16, %s35
      %p387 = scmp.lt.s32.totalorder %s385, 2
      %s388 = scalar_select %p387, %s385, 2
      %p389 = scmp.lt.s32.totalorder %s386, 15
      %s390 = scalar_select %p389, %s386, 15
      %s391 = smul.addr %s388, 16
      %s392 = sadd.s32 %s390, %s391
      %s393 = smul.addr %s392, 4
      %s394 = scalar_lea.vmem %s4, %s393
      %p395 = pneg %p133
      %p396 = pneg %p130
      %s397 = sld [smem:[#allocation5 + %s34]]
      %s398 = smul.u32 16, %s36
      %p399 = scmp.lt.s32.totalorder %s397, 2
      %s400 = scalar_select %p399, %s397, 2
      %p401 = scmp.lt.s32.totalorder %s398, 15
      %s402 = scalar_select %p401, %s398, 15
      %s403 = smul.addr %s400, 16
      %s404 = sadd.s32 %s402, %s403
      %s405 = smul.addr %s404, 4
      %s406 = scalar_lea.vmem %s5, %s405
      %p407 = pneg %p163
      %p408 = pneg %p160
      %s409 = sld [smem:[#allocation4 + %s34]]
      %s410 = smul.u32 16, %s35
      %p411 = scmp.lt.s32.totalorder %s409, 2
      %s412 = scalar_select %p411, %s409, 2
      %p413 = scmp.lt.s32.totalorder %s410, 15
      %s414 = scalar_select %p413, %s410, 15
      %s415 = smul.addr %s412, 16
      %s416 = sadd.s32 %s414, %s415
      %s417 = smul.addr %s416, 8
      %s418 = scalar_lea.vmem %s6, %s417
      %p419 = pneg %p193
      %p420 = pneg %p190
      %s421 = sld [smem:[#allocation5 + %s34]]
      %p422 = scmp.lt.s32.totalorder %s421, 2
      %s423 = scalar_select %p422, %s421, 2
      %p424 = scmp.lt.s32.totalorder %s36, 0
      %s425 = scalar_select %p424, %s36, 0
      %s426 = sadd.s32 %s425, %s423
      %s427 = scalar_lea.vmem %s7, %s426
      %p428 = pneg %p223
      %p429 = pneg %p220
      %p430 = pneg %p249
      %p431 = pneg %p246
      %p432 = scmp.lt.s32.totalorder %s34, 2
      %s433 = scalar_select %p432, %s34, 2
      %s434 = scalar_lea.vmem %s8, %s433
      %s435 = sld [smem:[#allocation4 + %s34]]
      %s436 = smul.u32 16, %s35
      %p437 = scmp.lt.s32.totalorder %s435, 2
      %s438 = scalar_select %p437, %s435, 2
      %p439 = scmp.lt.s32.totalorder %s436, 15
      %s440 = scalar_select %p439, %s436, 15
      %s441 = smul.addr %s438, 16
      %s442 = sadd.s32 %s440, %s441
      %s443 = smul.addr %s442, 4
      %s444 = scalar_lea.vmem %s2, %s443
      %s445 = sld [smem:[#allocation4 + %s34]]
      %s446 = smul.u32 16, %s35
      %s447 = sld [smem:[#allocation4 + %s34]]
      %s448 = smul.u32 16, %s36
      %p449 = scmp.lt.s32.totalorder %s447, 2
      %s450 = scalar_select %p449, %s447, 2
      %p451 = scmp.lt.s32.totalorder %s448, 15
      %s452 = scalar_select %p451, %s448, 15
      %s453 = smul.addr %s450, 16
      %s454 = sadd.s32 %s452, %s453
      %s455 = smul.addr %s454, 4
      %s456 = scalar_lea.vmem %s3, %s455
      %s457 = sld [smem:[#allocation4 + %s34]]
      %s458 = smul.u32 16, %s36
      %s459 = sld [smem:[#allocation5 + %s34]]
      %s460 = smul.u32 16, %s35
      %p461 = scmp.lt.s32.totalorder %s459, 2
      %s462 = scalar_select %p461, %s459, 2
      %p463 = scmp.lt.s32.totalorder %s460, 15
      %s464 = scalar_select %p463, %s460, 15
      %s465 = smul.addr %s462, 16
      %s466 = sadd.s32 %s464, %s465
      %s467 = smul.addr %s466, 4
      %s468 = scalar_lea.vmem %s4, %s467
      %s469 = sld [smem:[#allocation5 + %s34]]
      %s470 = smul.u32 16, %s35
      %s471 = sld [smem:[#allocation5 + %s34]]
      %s472 = smul.u32 16, %s36
      %p473 = scmp.lt.s32.totalorder %s471, 2
      %s474 = scalar_select %p473, %s471, 2
      %p475 = scmp.lt.s32.totalorder %s472, 15
      %s476 = scalar_select %p475, %s472, 15
      %s477 = smul.addr %s474, 16
      %s478 = sadd.s32 %s476, %s477
      %s479 = smul.addr %s478, 4
      %s480 = scalar_lea.vmem %s5, %s479
      %s481 = sld [smem:[#allocation5 + %s34]]
      %s482 = smul.u32 16, %s36
      %s483 = sld [smem:[#allocation4 + %s34]]
      %s484 = smul.u32 16, %s35
      %p485 = scmp.lt.s32.totalorder %s483, 2
      %s486 = scalar_select %p485, %s483, 2
      %p487 = scmp.lt.s32.totalorder %s484, 15
      %s488 = scalar_select %p487, %s484, 15
      %s489 = smul.addr %s486, 16
      %s490 = sadd.s32 %s488, %s489
      %s491 = smul.addr %s490, 8
      %s492 = scalar_lea.vmem %s6, %s491
      %s493 = sld [smem:[#allocation4 + %s34]]
      %s494 = smul.u32 16, %s35
      %s495 = sld [smem:[#allocation5 + %s34]]
      %p496 = scmp.lt.s32.totalorder %s495, 2
      %s497 = scalar_select %p496, %s495, 2
      %p498 = scmp.lt.s32.totalorder %s36, 0
      %s499 = scalar_select %p498, %s36, 0
      %s500 = sadd.s32 %s499, %s497
      %s501 = scalar_lea.vmem %s7, %s500
      %s502 = sld [smem:[#allocation5 + %s34]]
      %p503 = scmp.lt.s32.totalorder %s34, 2
      %s504 = scalar_select %p503, %s34, 2
      %s505 = scalar_lea.vmem %s8, %s504
      %p507 = scmp.eq.s32.totalorder %s35, 0
      %p508 = scmp.eq.s32.totalorder %s36, 0
      %p509 = pnand %p507, %p508
      %p510 = pneg %p509
      // Predicated region
      $region45: #{_sim_align_pallas.3} parent=43 // pred_check
        _
      $region46: #{_sim_align_pallas.3} parent=43 // pred_check_branch
        %512 = sbr.rel (%p509) target = $region48
      $region47: #{_sim_align_pallas.3} parent=43 // pred_region
        %513 = vst [vmem:[#allocation2] sm:$0x1] 0.0
      $region48: #{_sim_align_pallas.3} parent=43 // pred_fallthru
        _
      %v514 = vld [vmem:[%s444] sm:$0xf]
      %v515 = vld [vmem:[%s444 + $0x4] sm:$0xf]
      %v516 = vld [vmem:[%s444 + $0x8] sm:$0xf]
      %v517 = vld [vmem:[%s444 + $0xc] sm:$0xf]
      %v518 = vld [vmem:[%s444 + $0x10] sm:$0xf]
      %v519 = vld [vmem:[%s444 + $0x14] sm:$0xf]
      %v520 = vld [vmem:[%s444 + $0x18] sm:$0xf]
      %v521 = vld [vmem:[%s444 + $0x1c] sm:$0xf]
      %v522 = vld [vmem:[%s444 + $0x20] sm:$0xf]
      %v523 = vld [vmem:[%s444 + $0x24] sm:$0xf]
      %v524 = vld [vmem:[%s444 + $0x28] sm:$0xf]
      %v525 = vld [vmem:[%s444 + $0x2c] sm:$0xf]
      %v526 = vld [vmem:[%s444 + $0x30] sm:$0xf]
      %v527 = vld [vmem:[%s444 + $0x34] sm:$0xf]
      %v528 = vld [vmem:[%s444 + $0x38] sm:$0xf]
      %v529 = vld [vmem:[%s444 + $0x3c] sm:$0xf]
      %v530 = vld [vmem:[%s456] sm:$0xf]
      %v531 = vld [vmem:[%s456 + $0x4] sm:$0xf]
      %v532 = vld [vmem:[%s456 + $0x8] sm:$0xf]
      %v533 = vld [vmem:[%s456 + $0xc] sm:$0xf]
      %v534 = vld [vmem:[%s456 + $0x10] sm:$0xf]
      %v535 = vld [vmem:[%s456 + $0x14] sm:$0xf]
      %v536 = vld [vmem:[%s456 + $0x18] sm:$0xf]
      %v537 = vld [vmem:[%s456 + $0x1c] sm:$0xf]
      %v538 = vld [vmem:[%s456 + $0x20] sm:$0xf]
      %v539 = vld [vmem:[%s456 + $0x24] sm:$0xf]
      %v540 = vld [vmem:[%s456 + $0x28] sm:$0xf]
      %v541 = vld [vmem:[%s456 + $0x2c] sm:$0xf]
      %v542 = vld [vmem:[%s456 + $0x30] sm:$0xf]
      %v543 = vld [vmem:[%s456 + $0x34] sm:$0xf]
      %v544 = vld [vmem:[%s456 + $0x38] sm:$0xf]
      %v545 = vld [vmem:[%s456 + $0x3c] sm:$0xf]
      %v562 = vunpack.c.l.b16 %v514
      %v563 = vunpack.c.l.b16 %v515
      %v564 = vunpack.c.l.b16 %v516
      %v565 = vunpack.c.l.b16 %v517
      %v566 = vunpack.c.l.b16 %v518
      %v567 = vunpack.c.l.b16 %v519
      %v568 = vunpack.c.l.b16 %v520
      %v569 = vunpack.c.l.b16 %v521
      %v570 = vunpack.c.l.b16 %v522
      %v571 = vunpack.c.l.b16 %v523
      %v572 = vunpack.c.l.b16 %v524
      %v573 = vunpack.c.l.b16 %v525
      %v574 = vunpack.c.l.b16 %v526
      %v575 = vunpack.c.l.b16 %v527
      %v576 = vunpack.c.l.b16 %v528
      %v577 = vunpack.c.l.b16 %v529
      %v578 = vpack.c.b16 %v563, %v562
      %v579 = vpack.c.b16 %v565, %v564
      %v580 = vpack.c.b16 %v567, %v566
      %v581 = vpack.c.b16 %v569, %v568
      %v582 = vpack.c.b16 %v571, %v570
      %v583 = vpack.c.b16 %v573, %v572
      %v584 = vpack.c.b16 %v575, %v574
      %v585 = vpack.c.b16 %v577, %v576
      %v610 = vunpack.c.l.b16 %v530
      %v611 = vunpack.c.l.b16 %v531
      %v612 = vunpack.c.l.b16 %v532
      %v613 = vunpack.c.l.b16 %v533
      %v614 = vunpack.c.l.b16 %v534
      %v615 = vunpack.c.l.b16 %v535
      %v616 = vunpack.c.l.b16 %v536
      %v617 = vunpack.c.l.b16 %v537
      %v618 = vunpack.c.l.b16 %v538
      %v619 = vunpack.c.l.b16 %v539
      %v620 = vunpack.c.l.b16 %v540
      %v621 = vunpack.c.l.b16 %v541
      %v622 = vunpack.c.l.b16 %v542
      %v623 = vunpack.c.l.b16 %v543
      %v624 = vunpack.c.l.b16 %v544
      %v625 = vunpack.c.l.b16 %v545
      %v626 = vpack.c.b16 %v611, %v610
      %v627 = vpack.c.b16 %v613, %v612
      %v628 = vpack.c.b16 %v615, %v614
      %v629 = vpack.c.b16 %v617, %v616
      %v630 = vpack.c.b16 %v619, %v618
      %v631 = vpack.c.b16 %v621, %v620
      %v632 = vpack.c.b16 %v623, %v622
      %v633 = vpack.c.b16 %v625, %v624
      %642 = vmatprep.subr.bf16.mxu0 0
      %643 = vmatpush1.bf16.xpose.msra.mxu0 %v633
      %644 = vmatprep.subr.bf16.mxu0 0
      %645 = vmatpush1.bf16.xpose.msra.mxu0 %v632
      %646 = vmatprep.subr.bf16.mxu0 0
      %647 = vmatpush1.bf16.xpose.msra.mxu0 %v631
      %648 = vmatprep.subr.bf16.mxu0 0
      %649 = vmatpush1.bf16.xpose.msra.mxu0 %v630
      %650 = vmatprep.subr.bf16.mxu0 0
      %651 = vmatpush1.bf16.xpose.msra.mxu0 %v629
      %652 = vmatprep.subr.bf16.mxu0 0
      %653 = vmatpush1.bf16.xpose.msra.mxu0 %v628
      %654 = vmatprep.subr.bf16.mxu0 0
      %655 = vmatpush1.bf16.xpose.msra.mxu0 %v627
      %656 = vmatprep.subr.bf16.mxu0 0
      %657 = vmatpush1.bf16.xpose.msra.mxu0 %v626
      %658 = vmatprep.subr.bf16.mxu0 0
      %659 = vmatpush2.bf16.xpose.msra.mxu0 0
      %660 = vmatprep.subr.bf16.mxu0 0
      %661 = vmatpush2.bf16.xpose.msra.mxu0 0
      %662 = vmatprep.subr.bf16.mxu0 0
      %663 = vmatpush2.bf16.xpose.msra.mxu0 0
      %664 = vmatprep.subr.bf16.mxu0 0
      %665 = vmatpush2.bf16.xpose.msra.mxu0 0
      %666 = vmatprep.subr.bf16.mxu0 0
      %667 = vmatpush2.bf16.xpose.msra.mxu0 0
      %668 = vmatprep.subr.bf16.mxu0 0
      %669 = vmatpush2.bf16.xpose.msra.mxu0 0
      %670 = vmatprep.subr.bf16.mxu0 0
      %671 = vmatpush2.bf16.xpose.msra.mxu0 0
      %672 = vmatprep.subr.bf16.mxu0 0
      %673 = vmatpush2.bf16.xpose.msra.mxu0 0
      %674 = vmatprep.mubr.bf16.mxu0 0
      %675 = vmatmul.mubr.bf16.gmra.mxu0 %v578
      %v676 = vpop.f32.mrf.mxu0
      %v677 = vadd.f32 0.0, %v676
      %v678 = vpop.f32.mrf.mxu0
      %v679 = vpop.f32.mrf.mxu0
      %v680 = vadd.f32 0.0, %v679
      %v681 = vpop.f32.mrf.mxu0
      %682 = vmatprep.mubr.bf16.mxu0 0
      %683 = vmatmul.mubr.bf16.gmra.mxu0 %v579
      %v684 = vpop.f32.mrf.mxu0
      %v685 = vadd.f32 0.0, %v684
      %v686 = vpop.f32.mrf.mxu0
      %v687 = vpop.f32.mrf.mxu0
      %v688 = vadd.f32 0.0, %v687
      %v689 = vpop.f32.mrf.mxu0
      %690 = vmatprep.mubr.bf16.mxu0 0
      %691 = vmatmul.mubr.bf16.gmra.mxu0 %v580
      %v692 = vpop.f32.mrf.mxu0
      %v693 = vadd.f32 0.0, %v692
      %v694 = vpop.f32.mrf.mxu0
      %v695 = vpop.f32.mrf.mxu0
      %v696 = vadd.f32 0.0, %v695
      %v697 = vpop.f32.mrf.mxu0
      %698 = vmatprep.mubr.bf16.mxu0 0
      %699 = vmatmul.mubr.bf16.gmra.mxu0 %v581
      %v700 = vpop.f32.mrf.mxu0
      %v701 = vadd.f32 0.0, %v700
      %v702 = vpop.f32.mrf.mxu0
      %v703 = vpop.f32.mrf.mxu0
      %v704 = vadd.f32 0.0, %v703
      %v705 = vpop.f32.mrf.mxu0
      %706 = vmatprep.mubr.bf16.mxu0 0
      %707 = vmatmul.mubr.bf16.gmra.mxu0 %v582
      %v708 = vpop.f32.mrf.mxu0
      %v709 = vadd.f32 0.0, %v708
      %v710 = vpop.f32.mrf.mxu0
      %v711 = vpop.f32.mrf.mxu0
      %v712 = vadd.f32 0.0, %v711
      %v713 = vpop.f32.mrf.mxu0
      %714 = vmatprep.mubr.bf16.mxu0 0
      %715 = vmatmul.mubr.bf16.gmra.mxu0 %v583
      %v716 = vpop.f32.mrf.mxu0
      %v717 = vadd.f32 0.0, %v716
      %v718 = vpop.f32.mrf.mxu0
      %v719 = vpop.f32.mrf.mxu0
      %v720 = vadd.f32 0.0, %v719
      %v721 = vpop.f32.mrf.mxu0
      %722 = vmatprep.mubr.bf16.mxu0 0
      %723 = vmatmul.mubr.bf16.gmra.mxu0 %v584
      %v724 = vpop.f32.mrf.mxu0
      %v725 = vadd.f32 0.0, %v724
      %v726 = vpop.f32.mrf.mxu0
      %v727 = vpop.f32.mrf.mxu0
      %v728 = vadd.f32 0.0, %v727
      %v729 = vpop.f32.mrf.mxu0
      %730 = vmatprep.mubr.bf16.mxu0 0
      %731 = vmatmul.mubr.bf16.gmra.mxu0 %v585
      %v732 = vpop.f32.mrf.mxu0
      %v733 = vadd.f32 0.0, %v732
      %v734 = vpop.f32.mrf.mxu0
      %v735 = vpop.f32.mrf.mxu0
      %v736 = vadd.f32 0.0, %v735
      %v737 = vpop.f32.mrf.mxu0
      %738 = vdwg.mxu0
      %v739 = vld [vmem:[%s468] sm:$0xf]
      %v740 = vld [vmem:[%s468 + $0x4] sm:$0xf]
      %v741 = vld [vmem:[%s468 + $0x8] sm:$0xf]
      %v742 = vld [vmem:[%s468 + $0xc] sm:$0xf]
      %v743 = vld [vmem:[%s468 + $0x10] sm:$0xf]
      %v744 = vld [vmem:[%s468 + $0x14] sm:$0xf]
      %v745 = vld [vmem:[%s468 + $0x18] sm:$0xf]
      %v746 = vld [vmem:[%s468 + $0x1c] sm:$0xf]
      %v747 = vld [vmem:[%s468 + $0x20] sm:$0xf]
      %v748 = vld [vmem:[%s468 + $0x24] sm:$0xf]
      %v749 = vld [vmem:[%s468 + $0x28] sm:$0xf]
      %v750 = vld [vmem:[%s468 + $0x2c] sm:$0xf]
      %v751 = vld [vmem:[%s468 + $0x30] sm:$0xf]
      %v752 = vld [vmem:[%s468 + $0x34] sm:$0xf]
      %v753 = vld [vmem:[%s468 + $0x38] sm:$0xf]
      %v754 = vld [vmem:[%s468 + $0x3c] sm:$0xf]
      %v755 = vld [vmem:[%s480] sm:$0xf]
      %v756 = vld [vmem:[%s480 + $0x4] sm:$0xf]
      %v757 = vld [vmem:[%s480 + $0x8] sm:$0xf]
      %v758 = vld [vmem:[%s480 + $0xc] sm:$0xf]
      %v759 = vld [vmem:[%s480 + $0x10] sm:$0xf]
      %v760 = vld [vmem:[%s480 + $0x14] sm:$0xf]
      %v761 = vld [vmem:[%s480 + $0x18] sm:$0xf]
      %v762 = vld [vmem:[%s480 + $0x1c] sm:$0xf]
      %v763 = vld [vmem:[%s480 + $0x20] sm:$0xf]
      %v764 = vld [vmem:[%s480 + $0x24] sm:$0xf]
      %v765 = vld [vmem:[%s480 + $0x28] sm:$0xf]
      %v766 = vld [vmem:[%s480 + $0x2c] sm:$0xf]
      %v767 = vld [vmem:[%s480 + $0x30] sm:$0xf]
      %v768 = vld [vmem:[%s480 + $0x34] sm:$0xf]
      %v769 = vld [vmem:[%s480 + $0x38] sm:$0xf]
      %v770 = vld [vmem:[%s480 + $0x3c] sm:$0xf]
      %v787 = vunpack.c.l.b16 %v739
      %v788 = vunpack.c.l.b16 %v740
      %v789 = vunpack.c.l.b16 %v741
      %v790 = vunpack.c.l.b16 %v742
      %v791 = vunpack.c.l.b16 %v743
      %v792 = vunpack.c.l.b16 %v744
      %v793 = vunpack.c.l.b16 %v745
      %v794 = vunpack.c.l.b16 %v746
      %v795 = vunpack.c.l.b16 %v747
      %v796 = vunpack.c.l.b16 %v748
      %v797 = vunpack.c.l.b16 %v749
      %v798 = vunpack.c.l.b16 %v750
      %v799 = vunpack.c.l.b16 %v751
      %v800 = vunpack.c.l.b16 %v752
      %v801 = vunpack.c.l.b16 %v753
      %v802 = vunpack.c.l.b16 %v754
      %v803 = vpack.c.b16 %v788, %v787
      %v804 = vpack.c.b16 %v790, %v789
      %v805 = vpack.c.b16 %v792, %v791
      %v806 = vpack.c.b16 %v794, %v793
      %v807 = vpack.c.b16 %v796, %v795
      %v808 = vpack.c.b16 %v798, %v797
      %v809 = vpack.c.b16 %v800, %v799
      %v810 = vpack.c.b16 %v802, %v801
      %v835 = vunpack.c.l.b16 %v755
      %v836 = vunpack.c.l.b16 %v756
      %v837 = vunpack.c.l.b16 %v757
      %v838 = vunpack.c.l.b16 %v758
      %v839 = vunpack.c.l.b16 %v759
      %v840 = vunpack.c.l.b16 %v760
      %v841 = vunpack.c.l.b16 %v761
      %v842 = vunpack.c.l.b16 %v762
      %v843 = vunpack.c.l.b16 %v763
      %v844 = vunpack.c.l.b16 %v764
      %v845 = vunpack.c.l.b16 %v765
      %v846 = vunpack.c.l.b16 %v766
      %v847 = vunpack.c.l.b16 %v767
      %v848 = vunpack.c.l.b16 %v768
      %v849 = vunpack.c.l.b16 %v769
      %v850 = vunpack.c.l.b16 %v770
      %v851 = vpack.c.b16 %v836, %v835
      %v852 = vpack.c.b16 %v838, %v837
      %v853 = vpack.c.b16 %v840, %v839
      %v854 = vpack.c.b16 %v842, %v841
      %v855 = vpack.c.b16 %v844, %v843
      %v856 = vpack.c.b16 %v846, %v845
      %v857 = vpack.c.b16 %v848, %v847
      %v858 = vpack.c.b16 %v850, %v849
      %867 = vmatprep.subr.bf16.mxu0 0
      %868 = vmatpush1.bf16.xpose.msra.mxu0 %v858
      %869 = vmatprep.subr.bf16.mxu0 0
      %870 = vmatpush1.bf16.xpose.msra.mxu0 %v857
      %871 = vmatprep.subr.bf16.mxu0 0
      %872 = vmatpush1.bf16.xpose.msra.mxu0 %v856
      %873 = vmatprep.subr.bf16.mxu0 0
      %874 = vmatpush1.bf16.xpose.msra.mxu0 %v855
      %875 = vmatprep.subr.bf16.mxu0 0
      %876 = vmatpush1.bf16.xpose.msra.mxu0 %v854
      %877 = vmatprep.subr.bf16.mxu0 0
      %878 = vmatpush1.bf16.xpose.msra.mxu0 %v853
      %879 = vmatprep.subr.bf16.mxu0 0
      %880 = vmatpush1.bf16.xpose.msra.mxu0 %v852
      %881 = vmatprep.subr.bf16.mxu0 0
      %882 = vmatpush1.bf16.xpose.msra.mxu0 %v851
      %883 = vmatprep.subr.bf16.mxu0 0
      %884 = vmatpush2.bf16.xpose.msra.mxu0 0
      %885 = vmatprep.subr.bf16.mxu0 0
      %886 = vmatpush2.bf16.xpose.msra.mxu0 0
      %887 = vmatprep.subr.bf16.mxu0 0
      %888 = vmatpush2.bf16.xpose.msra.mxu0 0
      %889 = vmatprep.subr.bf16.mxu0 0
      %890 = vmatpush2.bf16.xpose.msra.mxu0 0
      %891 = vmatprep.subr.bf16.mxu0 0
      %892 = vmatpush2.bf16.xpose.msra.mxu0 0
      %893 = vmatprep.subr.bf16.mxu0 0
      %894 = vmatpush2.bf16.xpose.msra.mxu0 0
      %895 = vmatprep.subr.bf16.mxu0 0
      %896 = vmatpush2.bf16.xpose.msra.mxu0 0
      %897 = vmatprep.subr.bf16.mxu0 0
      %898 = vmatpush2.bf16.xpose.msra.mxu0 0
      %899 = vmatprep.mubr.bf16.mxu0 0
      %900 = vmatmul.mubr.bf16.gmra.mxu0 %v803
      %v901 = vpop.f32.mrf.mxu0
      %v902 = vadd.f32 0.0, %v901
      %v903 = vpop.f32.mrf.mxu0
      %v904 = vpop.f32.mrf.mxu0
      %v905 = vadd.f32 0.0, %v904
      %v906 = vpop.f32.mrf.mxu0
      %907 = vmatprep.mubr.bf16.mxu0 0
      %908 = vmatmul.mubr.bf16.gmra.mxu0 %v804
      %v909 = vpop.f32.mrf.mxu0
      %v910 = vadd.f32 0.0, %v909
      %v911 = vpop.f32.mrf.mxu0
      %v912 = vpop.f32.mrf.mxu0
      %v913 = vadd.f32 0.0, %v912
      %v914 = vpop.f32.mrf.mxu0
      %915 = vmatprep.mubr.bf16.mxu0 0
      %916 = vmatmul.mubr.bf16.gmra.mxu0 %v805
      %v917 = vpop.f32.mrf.mxu0
      %v918 = vadd.f32 0.0, %v917
      %v919 = vpop.f32.mrf.mxu0
      %v920 = vpop.f32.mrf.mxu0
      %v921 = vadd.f32 0.0, %v920
      %v922 = vpop.f32.mrf.mxu0
      %923 = vmatprep.mubr.bf16.mxu0 0
      %924 = vmatmul.mubr.bf16.gmra.mxu0 %v806
      %v925 = vpop.f32.mrf.mxu0
      %v926 = vadd.f32 0.0, %v925
      %v927 = vpop.f32.mrf.mxu0
      %v928 = vpop.f32.mrf.mxu0
      %v929 = vadd.f32 0.0, %v928
      %v930 = vpop.f32.mrf.mxu0
      %931 = vmatprep.mubr.bf16.mxu0 0
      %932 = vmatmul.mubr.bf16.gmra.mxu0 %v807
      %v933 = vpop.f32.mrf.mxu0
      %v934 = vadd.f32 0.0, %v933
      %v935 = vpop.f32.mrf.mxu0
      %v936 = vpop.f32.mrf.mxu0
      %v937 = vadd.f32 0.0, %v936
      %v938 = vpop.f32.mrf.mxu0
      %939 = vmatprep.mubr.bf16.mxu0 0
      %940 = vmatmul.mubr.bf16.gmra.mxu0 %v808
      %v941 = vpop.f32.mrf.mxu0
      %v942 = vadd.f32 0.0, %v941
      %v943 = vpop.f32.mrf.mxu0
      %v944 = vpop.f32.mrf.mxu0
      %v945 = vadd.f32 0.0, %v944
      %v946 = vpop.f32.mrf.mxu0
      %947 = vmatprep.mubr.bf16.mxu0 0
      %948 = vmatmul.mubr.bf16.gmra.mxu0 %v809
      %v949 = vpop.f32.mrf.mxu0
      %v950 = vadd.f32 0.0, %v949
      %v951 = vpop.f32.mrf.mxu0
      %v952 = vpop.f32.mrf.mxu0
      %v953 = vadd.f32 0.0, %v952
      %v954 = vpop.f32.mrf.mxu0
      %955 = vmatprep.mubr.bf16.mxu0 0
      %956 = vmatmul.mubr.bf16.gmra.mxu0 %v810
      %v957 = vpop.f32.mrf.mxu0
      %v958 = vadd.f32 0.0, %v957
      %v959 = vpop.f32.mrf.mxu0
      %v960 = vpop.f32.mrf.mxu0
      %v961 = vadd.f32 0.0, %v960
      %v962 = vpop.f32.mrf.mxu0
      %963 = vdwg.mxu0
      %v964 = vld [vmem:[%s492] sm:$0xff]
      %v965 = vld [vmem:[%s492 + $0x8] sm:$0xff]
      %v966 = vld [vmem:[%s492 + $0x10] sm:$0xff]
      %v967 = vld [vmem:[%s492 + $0x18] sm:$0xff]
      %v968 = vld [vmem:[%s492 + $0x20] sm:$0xff]
      %v969 = vld [vmem:[%s492 + $0x28] sm:$0xff]
      %v970 = vld [vmem:[%s492 + $0x30] sm:$0xff]
      %v971 = vld [vmem:[%s492 + $0x38] sm:$0xff]
      %v972 = vld [vmem:[%s492 + $0x40] sm:$0xff]
      %v973 = vld [vmem:[%s492 + $0x48] sm:$0xff]
      %v974 = vld [vmem:[%s492 + $0x50] sm:$0xff]
      %v975 = vld [vmem:[%s492 + $0x58] sm:$0xff]
      %v976 = vld [vmem:[%s492 + $0x60] sm:$0xff]
      %v977 = vld [vmem:[%s492 + $0x68] sm:$0xff]
      %v978 = vld [vmem:[%s492 + $0x70] sm:$0xff]
      %v979 = vld [vmem:[%s492 + $0x78] sm:$0xff]
      %v980 = vadd.f32 %v964, 1e-06
      %v981 = vadd.f32 %v965, 1e-06
      %v982 = vadd.f32 %v966, 1e-06
      %v983 = vadd.f32 %v967, 1e-06
      %v984 = vadd.f32 %v968, 1e-06
      %v985 = vadd.f32 %v969, 1e-06
      %v986 = vadd.f32 %v970, 1e-06
      %v987 = vadd.f32 %v971, 1e-06
      %v988 = vadd.f32 %v972, 1e-06
      %v989 = vadd.f32 %v973, 1e-06
      %v990 = vadd.f32 %v974, 1e-06
      %v991 = vadd.f32 %v975, 1e-06
      %v992 = vadd.f32 %v976, 1e-06
      %v993 = vadd.f32 %v977, 1e-06
      %v994 = vadd.f32 %v978, 1e-06
      %v995 = vadd.f32 %v979, 1e-06
      %v996 = vld [vmem:[%s501] sm:$0x1]
      %v997 = vadd.f32 %v996, 1e-06
      %999 = vset.pattern.permute.xlu0 0
      %1000 = vperm.xlu0 %999, %v980
      %v1001 = vpop.permute.xlu0 %1000
      %1004 = vset.pattern.permute.xlu0 0
      %1005 = vperm.xlu0 %1004, %v981
      %v1006 = vpop.permute.xlu0 %1005
      %1009 = vset.pattern.permute.xlu0 0
      %1010 = vperm.xlu0 %1009, %v982
      %v1011 = vpop.permute.xlu0 %1010
      %1014 = vset.pattern.permute.xlu0 0
      %1015 = vperm.xlu0 %1014, %v983
      %v1016 = vpop.permute.xlu0 %1015
      %1019 = vset.pattern.permute.xlu0 0
      %1020 = vperm.xlu0 %1019, %v984
      %v1021 = vpop.permute.xlu0 %1020
      %1024 = vset.pattern.permute.xlu0 0
      %1025 = vperm.xlu0 %1024, %v985
      %v1026 = vpop.permute.xlu0 %1025
      %1029 = vset.pattern.permute.xlu0 0
      %1030 = vperm.xlu0 %1029, %v986
      %v1031 = vpop.permute.xlu0 %1030
      %1034 = vset.pattern.permute.xlu0 0
      %1035 = vperm.xlu0 %1034, %v987
      %v1036 = vpop.permute.xlu0 %1035
      %1039 = vset.pattern.permute.xlu0 0
      %1040 = vperm.xlu0 %1039, %v988
      %v1041 = vpop.permute.xlu0 %1040
      %1044 = vset.pattern.permute.xlu0 0
      %1045 = vperm.xlu0 %1044, %v989
      %v1046 = vpop.permute.xlu0 %1045
      %1049 = vset.pattern.permute.xlu0 0
      %1050 = vperm.xlu0 %1049, %v990
      %v1051 = vpop.permute.xlu0 %1050
      %1054 = vset.pattern.permute.xlu0 0
      %1055 = vperm.xlu0 %1054, %v991
      %v1056 = vpop.permute.xlu0 %1055
      %1059 = vset.pattern.permute.xlu0 0
      %1060 = vperm.xlu0 %1059, %v992
      %v1061 = vpop.permute.xlu0 %1060
      %1064 = vset.pattern.permute.xlu0 0
      %1065 = vperm.xlu0 %1064, %v993
      %v1066 = vpop.permute.xlu0 %1065
      %1069 = vset.pattern.permute.xlu0 0
      %1070 = vperm.xlu0 %1069, %v994
      %v1071 = vpop.permute.xlu0 %1070
      %1074 = vset.pattern.permute.xlu0 0
      %1075 = vperm.xlu0 %1074, %v995
      %v1076 = vpop.permute.xlu0 %1075
      %v1079 = vlaneseq
      %v1080 = vshrl.u32 %v1079, 7
      %v1081 = vsub.s32 0, %v1080
      %v1082 = vrot.slane %v997, %v1081
      %v1084 = vmul.f32 %v1001, %v1082
      %v1085 = vmul.f32 %v1006, %v1082
      %v1086 = vmul.f32 %v1011, %v1082
      %v1087 = vmul.f32 %v1016, %v1082
      %v1088 = vmul.f32 %v1021, %v1082
      %v1089 = vmul.f32 %v1026, %v1082
      %v1090 = vmul.f32 %v1031, %v1082
      %v1091 = vmul.f32 %v1036, %v1082
      %v1092 = vmul.f32 %v1041, %v1082
      %v1093 = vmul.f32 %v1046, %v1082
      %v1094 = vmul.f32 %v1051, %v1082
      %v1095 = vmul.f32 %v1056, %v1082
      %v1096 = vmul.f32 %v1061, %v1082
      %v1097 = vmul.f32 %v1066, %v1082
      %v1098 = vmul.f32 %v1071, %v1082
      %v1099 = vmul.f32 %v1076, %v1082
      %v1100 = vsub.f32 %v677, %v902
      %v1101 = vsub.f32 %v680, %v905
      %v1102 = vsub.f32 %v685, %v910
      %v1103 = vsub.f32 %v688, %v913
      %v1104 = vsub.f32 %v693, %v918
      %v1105 = vsub.f32 %v696, %v921
      %v1106 = vsub.f32 %v701, %v926
      %v1107 = vsub.f32 %v704, %v929
      %v1108 = vsub.f32 %v709, %v934
      %v1109 = vsub.f32 %v712, %v937
      %v1110 = vsub.f32 %v717, %v942
      %v1111 = vsub.f32 %v720, %v945
      %v1112 = vsub.f32 %v725, %v950
      %v1113 = vsub.f32 %v728, %v953
      %v1114 = vsub.f32 %v733, %v958
      %v1115 = vsub.f32 %v736, %v961
      %v1116 = vmul.f32 %v1084, %v1100
      %v1117 = vmul.f32 %v1085, %v1101
      %v1118 = vmul.f32 %v1086, %v1102
      %v1119 = vmul.f32 %v1087, %v1103
      %v1120 = vmul.f32 %v1088, %v1104
      %v1121 = vmul.f32 %v1089, %v1105
      %v1122 = vmul.f32 %v1090, %v1106
      %v1123 = vmul.f32 %v1091, %v1107
      %v1124 = vmul.f32 %v1092, %v1108
      %v1125 = vmul.f32 %v1093, %v1109
      %v1126 = vmul.f32 %v1094, %v1110
      %v1127 = vmul.f32 %v1095, %v1111
      %v1128 = vmul.f32 %v1096, %v1112
      %v1129 = vmul.f32 %v1097, %v1113
      %v1130 = vmul.f32 %v1098, %v1114
      %v1131 = vmul.f32 %v1099, %v1115
      %v1132 = vld [vmem:[#allocation2] sm:$0x1]
      %v1133 = vmul.f32 %v1116, %v1116
      %v1134 = vmul.f32 %v1117, %v1117
      %v1135 = vmul.f32 %v1118, %v1118
      %v1136 = vmul.f32 %v1119, %v1119
      %v1137 = vmul.f32 %v1120, %v1120
      %v1138 = vmul.f32 %v1121, %v1121
      %v1139 = vmul.f32 %v1122, %v1122
      %v1140 = vmul.f32 %v1123, %v1123
      %v1141 = vmul.f32 %v1124, %v1124
      %v1142 = vmul.f32 %v1125, %v1125
      %v1143 = vmul.f32 %v1126, %v1126
      %v1144 = vmul.f32 %v1127, %v1127
      %v1145 = vmul.f32 %v1128, %v1128
      %v1146 = vmul.f32 %v1129, %v1129
      %v1147 = vmul.f32 %v1130, %v1130
      %v1148 = vmul.f32 %v1131, %v1131
      %v1149 = vadd.f32 %v1133, %v1134
      %v1150 = vadd.f32 %v1149, %v1135
      %v1151 = vadd.f32 %v1150, %v1136
      %v1152 = vadd.f32 %v1151, %v1137
      %v1153 = vadd.f32 %v1152, %v1138
      %v1154 = vadd.f32 %v1153, %v1139
      %v1155 = vadd.f32 %v1154, %v1140
      %v1156 = vadd.f32 %v1155, %v1141
      %v1157 = vadd.f32 %v1156, %v1142
      %v1158 = vadd.f32 %v1157, %v1143
      %v1159 = vadd.f32 %v1158, %v1144
      %v1160 = vadd.f32 %v1159, %v1145
      %v1161 = vadd.f32 %v1160, %v1146
      %v1162 = vadd.f32 %v1161, %v1147
      %v1163 = vadd.f32 %v1162, %v1148
      %v1164 = vrot.slane %v1163, 4
      %v1165 = vadd.f32 %v1163, %v1164
      %v1166 = vrot.slane %v1165, 2
      %v1167 = vadd.f32 %v1165, %v1166
      %v1168 = vrot.slane %v1167, 1
      %v1169 = vadd.f32 %v1167, %v1168
      %v1170 = vadd.f32 %v1132, %v1169
      %1171 = vst [vmem:[#allocation2] sm:$0x1] %v1170
      // Predicated region
      $region49: #{_sim_align_pallas.3} parent=43 // pred_check
        _
      $region50: #{_sim_align_pallas.3} parent=43 // pred_check_branch
        %1173 = sbr.rel (%p509) target = $region52
      $region51: #{_sim_align_pallas.3} parent=43 // pred_region
        %v1174 = vld [vmem:[#allocation2] sm:$0x1]
        %vm1175 = vcmask 1040384
        %v1176 = vsel %vm1175, %v1174, 0.0
        %1177 = vadd.xlane.f32.xlu0 %v1176
        %v1178 = vpop.xlane.xlu0 %1177
        %1179 = vst [vmem:[%s505] sm:$0x1] %v1178
      $region52: #{_sim_align_pallas.3} parent=43 // pred_fallthru
        _
      %p1180 = scmp.lt.s32.totalorder %s34, 2
      %s1181 = scalar_select %p1180, %s34, 2
      %s1182 = scalar_lea.vmem %s8, %s1181
      // Predicated region
      $region53: #{_sim_align_pallas.3} parent=43 // pred_check
        %p1183 = pneg %p246
      $region54: #{_sim_align_pallas.3} parent=43 // pred_check_branch
        %1185 = sbr.rel (%p1183) target = $region56
      $region55: #{_sim_align_pallas.3} parent=43 // pred_region
        _
      $region56: #{_sim_align_pallas.3} parent=43 // pred_fallthru
        _
    $region44: #{_sim_align_pallas.3} parent=5 // pred_fallthru
      _
    %p1186 = scmp.le.s32.totalorder 2, %s24
    // Predicated region
    $region57: #{_sim_align_pallas.3} parent=5 // pred_check
      %p1187 = pneg %p1186
    $region58: #{_sim_align_pallas.3} parent=5 // pred_check_branch
      %1189 = sbr.rel (%p1187) target = $region60
    $region59: #{_sim_align_pallas.3} parent=5 // pred_region
      %s1190 = ssub.s32 %s24, 2
      // Predicated region
      $region61: #{_sim_align_pallas.3} parent=59 // pred_check
        %p1191 = pneg %p252
      $region62: #{_sim_align_pallas.3} parent=59 // pred_check_branch
        %1193 = sbr.rel (%p1191) target = $region64
      $region63: #{_sim_align_pallas.3} parent=59 // pred_region
        %p1194 = scmp.lt.s32.totalorder %s37, 2
        %s1195 = scalar_select %p1194, %s37, 2
        %s1196 = scalar_lea.vmem %s8, %s1195
      $region64: #{_sim_align_pallas.3} parent=59 // pred_fallthru
        _
    $region60: #{_sim_align_pallas.3} parent=5 // pred_fallthru
      _
  $region6: #{_sim_align_pallas.3} parent=0 // loop_footer
    %s28 = sadd.s32 1, %s24
  $region7: #{_sim_align_pallas.3} parent=0 // loop_footer_branch
    %23 = sbr.rel target = $region3
  $region8: #{_sim_align_pallas.3} parent=0 // loop_exit
    _

</llo_original>
